<compile_context>
chip_gen: v7x
topology: tpu7x:2x2x1
jax: 0.10.0
libtpu: 0.0.40
codegen_flags: <defaults>
</compile_context>

<pallas_src>
import numpy as np

import jax
import jax.numpy as jnp
from jax.experimental import pallas as pl
from jax.experimental.pallas import tpu as pltpu


IN_RAW, IN_PAD = 208, 256        # 13*4*4 input features, padded to 2*128
C1_PAD = 512                     # conv1 output 16*5*5 = 400, padded
C2 = 512                         # conv2 output 32*4*4 = 512 (already dense)
OUT_RAW, OUT_PAD = 208, 256      # 13*4*4 output features, padded


# ----------------------------------------------------------------------------
# The single fused Pallas kernel
# ----------------------------------------------------------------------------
def _fused_forward_kernel(x_ref, w1_ref, b1_ref, w2_ref, b2_ref,
                          wl_ref, bl_ref, w3_ref, b3_ref, w4_ref, b4_ref,
                          o_ref):
    f32 = jnp.float32
    wdt = w1_ref.dtype           # bf16 (MXU-native) or f32 (parity mode)

    def net(x):
        # conv1 (k=2, pad=1) + tanh, as one unrolled matmul: (m,256)@(256,512)
        h = jnp.tanh(jnp.dot(x.astype(wdt), w1_ref[...],
                             preferred_element_type=f32) + b1_ref[...])
        # conv2 (k=2) + tanh: (m,512)@(512,512).  Columns are pre-permuted to
        # (pool_pos, pool_window, channel) order so the max-pool is slice-wise.
        h = jnp.tanh(jnp.dot(h.astype(wdt), w2_ref[...],
                             preferred_element_type=f32) + b2_ref[...])
        # maxpool2d(2,2): max over the 4 window positions (4 lane-dense slices)
        pmax = jnp.maximum(jnp.maximum(h[:, 0:128], h[:, 128:256]),
                           jnp.maximum(h[:, 256:384], h[:, 384:512]))
        # linear1 ∘ linear_trans1 folded into one (128,128) matmul
        z = jnp.dot(pmax.astype(wdt), wl_ref[...],
                    preferred_element_type=f32) + bl_ref[...]
        # conv_trans1 (k=2) + tanh: (m,128)@(128,256)
        g = jnp.tanh(jnp.dot(z.astype(wdt), w3_ref[...],
                             preferred_element_type=f32) + b3_ref[...])
        # conv_trans2 (k=2) + relu: (m,256)@(256,256)
        g = jnp.maximum(jnp.dot(g.astype(wdt), w4_ref[...],
                                preferred_element_type=f32) + b4_ref[...], 0.0)
        return g.astype(o_ref.dtype)

    bm = x_ref.shape[0]
    if bm >= 256 and bm % 16 == 0:
        # Two independent half-tiles: gives the LLO scheduler a second MXU/EUP
        # dependency chain to interleave with (serial per-tile chain otherwise).
        half = bm // 2
        o_ref[0:half, :] = net(x_ref[0:half, :])
        o_ref[half:bm, :] = net(x_ref[half:bm, :])
    else:
        o_ref[...] = net(x_ref[...])


# ----------------------------------------------------------------------------
# One-time host-side weight preparation: fold im2col / zero padding / conv-
# transpose scatter / layout permutations / the linear-linear product into
# dense, lane-dense-padded matrices acting on NCHW-flat vectors.
# ----------------------------------------------------------------------------
def _conv_unrolled(w, H, W, pad):
    """Conv2d weight (Cout,Cin,kh,kw), stride 1 -> (Cin*H*W, Cout*Ho*Wo) dense
    matrix on NCHW-flattened input/output (zero padding folded in)."""
    w = np.asarray(w, np.float32)
    Cout, Cin, kh, kw = w.shape
    Ho, Wo = H + 2 * pad - kh + 1, W + 2 * pad - kw + 1
    m = np.zeros((Cin, H, W, Cout, Ho, Wo), np.float32)
    for ky in range(kh):
        for kx in range(kw):
            for oh in range(Ho):
                ih = oh + ky - pad
                if ih < 0 or ih >= H:
                    continue
                for ow in range(Wo):
                    iw = ow + kx - pad
                    if iw < 0 or iw >= W:
                        continue
                    m[:, ih, iw, :, oh, ow] += w[:, :, ky, kx].T
    return m.reshape(Cin * H * W, Cout * Ho * Wo)


def _convT_unrolled(w, H, W):
    """ConvTranspose2d weight (Cin,Cout,kh,kw), stride 1, pad 0 ->
    (Cin*H*W, Cout*Ho*Wo) dense matrix on NCHW-flattened input/output."""
    w = np.asarray(w, np.float32)
    Cin, Cout, kh, kw = w.shape
    m = np.zeros((Cin, H, W, Cout, H + kh - 1, W + kw - 1), np.float32)
    for ky in range(kh):
        for kx in range(kw):
            for ih in range(H):
                for iw in range(W):
                    m[:, ih, iw, :, ih + ky, iw + kx] += w[:, :, ky, kx]
    return m.reshape(Cin * H * W, Cout * (H + kh - 1) * (W + kw - 1))


def _pad2d(a, rows, cols):
    out = np.zeros((rows, cols), np.float32)
    out[:a.shape[0], :a.shape[1]] = a
    return out


def _pad1d(a, n):
    out = np.zeros(n, np.float32)
    out[:a.shape[0]] = a
    return out


def prepare_params(p, dot_dtype=jnp.bfloat16):
    """Returns the 10 dense matrices / bias rows consumed by the fused kernel."""
    f32 = np.float32

    # conv1: 13x4x4 (208) -> 16x5x5 (400), padding=1 folded in.
    w1 = _conv_unrolled(p["conv1_w"], 4, 4, pad=1)                 # (208, 400)
    b1 = np.repeat(np.asarray(p["conv1_b"], f32), 25)              # (400,)

    # conv2: 16x5x5 (400) -> 32x4x4 (512); permute output columns to
    # (pool_pos, pool_window, channel) so the 2x2 max-pool is slice-wise.
    w2 = _conv_unrolled(p["conv2_w"], 5, 5, pad=0)                 # (400, 512)
    b2 = np.repeat(np.asarray(p["conv2_b"], f32), 16)              # (512,)
    perm2 = np.zeros(512, np.int64)
    for co in range(32):
        for oh in range(4):
            for ow in range(4):
                pos = (oh % 2) * 2 + (ow % 2)      # position inside 2x2 window
                win = (oh // 2) * 2 + (ow // 2)    # pooled output position
                perm2[pos * 128 + win * 32 + co] = co * 16 + oh * 4 + ow
    w2 = w2[:, perm2]
    b2 = b2[perm2]

    # linear1 (rows re-ordered from pooled (win, ch) layout to PyTorch's NCHW
    # flatten order) and linear_trans1 folded into ONE (128,128) matmul —
    # there is no activation between them in the reference forward.
    perm_pool = np.zeros(128, np.int64)
    for win in range(4):
        for co in range(32):
            perm_pool[win * 32 + co] = co * 4 + win
    wl1 = np.asarray(p["lin1_w"], f32).T[perm_pool, :]             # (128, 64)
    wl2 = np.asarray(p["lin2_w"], f32).T                           # (64, 128)
    wl = wl1 @ wl2                                                 # (128, 128)
    bl = np.asarray(p["lin1_b"], f32) @ wl2 + np.asarray(p["lin2_b"], f32)

    # conv_trans1: 32x2x2 (128) -> 16x3x3 (144)
    w3 = _convT_unrolled(p["ct1_w"], 2, 2)                         # (128, 144)
    b3 = np.repeat(np.asarray(p["ct1_b"], f32), 9)

    # conv_trans2: 16x3x3 (144) -> 13x4x4 (208)
    w4 = _convT_unrolled(p["ct2_w"], 3, 3)                         # (144, 208)
    b4 = np.repeat(np.asarray(p["ct2_b"], f32), 16)

    # Zero-pad every feature dim to a multiple of 128 (lane-dense slabs).
    w1 = _pad2d(w1, IN_PAD, C1_PAD); b1 = _pad1d(b1, C1_PAD)
    w2 = _pad2d(w2, C1_PAD, C2)                    # b2 already 512 wide
    w3 = _pad2d(w3, 128, 256);       b3 = _pad1d(b3, 256)
    w4 = _pad2d(w4, 256, OUT_PAD);   b4 = _pad1d(b4, OUT_PAD)

    weights = [jnp.asarray(a, dot_dtype) for a in (w1, w2, wl, w3, w4)]
    biases = [jnp.asarray(a, jnp.float32).reshape(1, -1)
              for a in (b1, b2, bl, b3, b4)]
    w1, w2, wl, w3, w4 = weights
    b1, b2, bl, b3, b4 = biases
    return (w1, b1, w2, b2, wl, bl, w3, b3, w4, b4)


def init_params(key):
    """Deterministic init, PyTorch-default-style uniform(-1/sqrt(fan_in), .)."""
    def uni(k, shape, fan_in):
        s = 1.0 / jnp.sqrt(jnp.float32(fan_in))
        return jax.random.uniform(k, shape, jnp.float32, -s, s)

    ks = jax.random.split(key, 12)
    p = {}
    p["conv1_w"] = uni(ks[0], (16, 13, 2, 2), 13 * 2 * 2)   # Conv2d(13,16,k=2,pad=1)
    p["conv1_b"] = uni(ks[1], (16,), 13 * 2 * 2)
    p["conv2_w"] = uni(ks[2], (32, 16, 2, 2), 16 * 2 * 2)   # Conv2d(16,32,k=2)
    p["conv2_b"] = uni(ks[3], (32,), 16 * 2 * 2)
    p["lin1_w"] = uni(ks[4], (64, 128), 128)                # Linear(128,64), (out,in)
    p["lin1_b"] = uni(ks[5], (64,), 128)
    p["lin2_w"] = uni(ks[6], (128, 64), 64)                 # Linear(64,128)
    p["lin2_b"] = uni(ks[7], (128,), 64)
    p["ct1_w"] = uni(ks[8], (32, 16, 2, 2), 32 * 2 * 2)     # ConvTranspose2d(32,16,k=2)
    p["ct1_b"] = uni(ks[9], (16,), 32 * 2 * 2)
    p["ct2_w"] = uni(ks[10], (16, 13, 2, 2), 16 * 2 * 2)    # ConvTranspose2d(16,13,k=2)
    p["ct2_b"] = uni(ks[11], (13,), 16 * 2 * 2)
    return p


# ----------------------------------------------------------------------------
# Wrapper: pad batch + features, one pallas_call, slice back.
# ----------------------------------------------------------------------------
def _round_up(x, m):
    return ((x + m - 1) // m) * m


def _choose_tiling(B):
    """Return (batch tile bm, padded batch Bp)."""
    if B < 16:
        return B, B                 # single block (block dim == full dim is legal)
    # Target ~512-row tiles; keep >=2 grid steps so both v7x TCs get work,
    # and pad the batch up to a tile multiple instead of shrinking the tile.
    bm = min(512, _round_up((B + 1) // 2, 8))
    Bp = _round_up(B, bm)
    return bm, Bp


def forward(x_nchw, mats):
    B = x_nchw.shape[0]
    bm, Bp = _choose_tiling(B)

    x2 = x_nchw.reshape(B, IN_RAW).astype(jnp.float32)     # NCHW-flat rows
    x2 = jnp.pad(x2, ((0, Bp - B), (0, IN_PAD - IN_RAW)))  # lane-dense input

    # Explicit VMEM budget: (double-buffered) weights + in/out tiles + live
    # f32 activation slabs, with headroom; stays far below v7x's 64 MiB.
    weight_bytes = sum(int(np.prod(a.shape)) * a.dtype.itemsize for a in mats)
    vmem_limit = max(int(2 * weight_bytes
                         + 4 * bm * IN_PAD * 4
                         + 8 * bm * C2 * 4) + (4 << 20),
                     16 << 20)

    grid = (Bp // bm,)
    out = pl.pallas_call(
        _fused_forward_kernel,
        out_shape=jax.ShapeDtypeStruct((Bp, OUT_PAD), jnp.float32),
        grid=grid,
        in_specs=[pl.BlockSpec((bm, IN_PAD), lambda i: (i, 0))]
                 + [pl.BlockSpec(a.shape, lambda i: (0, 0)) for a in mats],
        out_specs=pl.BlockSpec((bm, OUT_PAD), lambda i: (i, 0)),
        compiler_params=pltpu.CompilerParams(
            dimension_semantics=("parallel",),
            vmem_limit_bytes=vmem_limit),
    )(x2, *mats)

    return out[:B, :OUT_RAW].reshape(B, 13, 4, 4)


# ----------------------------------------------------------------------------
# Float64 numpy reference (ground truth for the tolerance test).
# ----------------------------------------------------------------------------
def _reference_forward_np(x, p):
    x = np.asarray(x, np.float64)

    def conv2d(x, w, b, pad):
        w = np.asarray(w, np.float64); b = np.asarray(b, np.float64)
        B, Cin, H, W = x.shape
        Cout, _, kh, kw = w.shape
        xp = np.zeros((B, Cin, H + 2 * pad, W + 2 * pad))
        xp[:, :, pad:pad + H, pad:pad + W] = x
        Ho, Wo = H + 2 * pad - kh + 1, W + 2 * pad - kw + 1
        out = np.zeros((B, Cout, Ho, Wo))
        for oh in range(Ho):
            for ow in range(Wo):
                patch = xp[:, :, oh:oh + kh, ow:ow + kw]
                out[:, :, oh, ow] = np.einsum('bikl,oikl->bo', patch, w)
        return out + b[None, :, None, None]

    def convT2d(x, w, b):
        w = np.asarray(w, np.float64); b = np.asarray(b, np.float64)
        B, Cin, H, W = x.shape
        _, Cout, kh, kw = w.shape
        out = np.zeros((B, Cout, H + kh - 1, W + kw - 1))
        for ih in range(H):
            for iw in range(W):
                out[:, :, ih:ih + kh, iw:iw + kw] += np.einsum(
                    'bi,iokl->bokl', x[:, :, ih, iw], w)
        return out + b[None, :, None, None]

    h = np.tanh(conv2d(x, p["conv1_w"], p["conv1_b"], 1))
    h = np.tanh(conv2d(h, p["conv2_w"], p["conv2_b"], 0))
    B, C, H, W = h.shape
    h = h.reshape(B, C, H // 2, 2, W // 2, 2).max(axis=(3, 5))    # maxpool 2x2
    v = h.reshape(B, -1)
    v = v @ np.asarray(p["lin1_w"], np.float64).T + np.asarray(p["lin1_b"], np.float64)
    v = v @ np.asarray(p["lin2_w"], np.float64).T + np.asarray(p["lin2_b"], np.float64)
    g = v.reshape(B, 32, 2, 2)
    g = np.tanh(convT2d(g, p["ct1_w"], p["ct1_b"]))
    g = np.maximum(convT2d(g, p["ct2_w"], p["ct2_b"]), 0.0)
    return g


if __name__ == "__main__":
    key = jax.random.PRNGKey(0)
    k_in, k_par = jax.random.split(key)
    x = jax.random.normal(k_in, (2, 13, 4, 4), dtype=jnp.float32)

    params = init_params(k_par)
    ref = _reference_forward_np(x, params)             # float64 ground truth

    fwd = jax.jit(forward)

    # Parity mode (f32 MXU operands): validates the folded conv/pool/linear
    # matrices and all layout permutations.
    out_f32 = jax.block_until_ready(fwd(x, prepare_params(params, jnp.float32)))
    np.testing.assert_allclose(np.asarray(out_f32), ref, rtol=5e-3, atol=5e-3)

    # Production mode (bf16 MXU operands, f32 accumulate + f32 activations).
    mats = prepare_params(params)                      # bf16 weights
    out = jax.block_until_ready(fwd(x, mats))
    assert out.shape == (2, 13, 4, 4) and out.dtype == jnp.float32
    np.testing.assert_allclose(np.asarray(out), ref, rtol=1e-1, atol=1e-1)

    print("KERNEL_OK")
</pallas_src>

<mosaic_0001>
module attributes {stable_mosaic.version = 11 : i64} {
  func.func @_fused_forward_kernel(%arg0: i32, %arg1: memref<2x256xf32, #tpu.memory_space<vmem>>, %arg2: memref<256x512xf32, #tpu.memory_space<vmem>>, %arg3: memref<1x512xf32, #tpu.memory_space<vmem>>, %arg4: memref<512x512xf32, #tpu.memory_space<vmem>>, %arg5: memref<1x512xf32, #tpu.memory_space<vmem>>, %arg6: memref<128x128xf32, #tpu.memory_space<vmem>>, %arg7: memref<1x128xf32, #tpu.memory_space<vmem>>, %arg8: memref<128x256xf32, #tpu.memory_space<vmem>>, %arg9: memref<1x256xf32, #tpu.memory_space<vmem>>, %arg10: memref<256x256xf32, #tpu.memory_space<vmem>>, %arg11: memref<1x256xf32, #tpu.memory_space<vmem>>, %arg12: memref<2x256xf32, #tpu.memory_space<vmem>>) attributes {dimension_semantics = [#tpu.dimension_semantics<parallel>], iteration_bounds = array<i64: 1>, scalar_prefetch = 0 : i64, scratch_operands = 0 : i64, tpu.core_type = #tpu.core_type<tc>, window_params = [{transform_indices = @transform_0, window_bounds = array<i64: 2, 256>}, {pipeline_mode = #tpu.pipeline_mode<synchronous>, transform_indices = @transform_1, window_bounds = array<i64: 256, 512>}, {pipeline_mode = #tpu.pipeline_mode<synchronous>, transform_indices = @transform_2, window_bounds = array<i64: 1, 512>}, {pipeline_mode = #tpu.pipeline_mode<synchronous>, transform_indices = @transform_3, window_bounds = array<i64: 512, 512>}, {pipeline_mode = #tpu.pipeline_mode<synchronous>, transform_indices = @transform_4, window_bounds = array<i64: 1, 512>}, {pipeline_mode = #tpu.pipeline_mode<synchronous>, transform_indices = @transform_5, window_bounds = array<i64: 128, 128>}, {pipeline_mode = #tpu.pipeline_mode<synchronous>, transform_indices = @transform_6, window_bounds = array<i64: 1, 128>}, {pipeline_mode = #tpu.pipeline_mode<synchronous>, transform_indices = @transform_7, window_bounds = array<i64: 128, 256>}, {pipeline_mode = #tpu.pipeline_mode<synchronous>, transform_indices = @transform_8, window_bounds = array<i64: 1, 256>}, {pipeline_mode = #tpu.pipeline_mode<synchronous>, transform_indices = @transform_9, window_bounds = array<i64: 256, 256>}, {pipeline_mode = #tpu.pipeline_mode<synchronous>, transform_indices = @transform_10, window_bounds = array<i64: 1, 256>}, {transform_indices = @transform_11, window_bounds = array<i64: 2, 256>}]} {
    %c0 = arith.constant 0 : index
    %c0_0 = arith.constant 0 : index
    %0 = vector.load %arg1[%c0, %c0_0] : memref<2x256xf32, #tpu.memory_space<vmem>>, vector<2x256xf32>
    %c0_1 = arith.constant 0 : index
    %c0_2 = arith.constant 0 : index
    %1 = vector.load %arg2[%c0_1, %c0_2] : memref<256x512xf32, #tpu.memory_space<vmem>>, vector<256x512xf32>
    %cst = arith.constant dense<0.000000e+00> : vector<2x512xf32>
    %2 = tpu.matmul %0, %1, %cst {dimension_numbers = #tpu.dot_dimension_numbers<[1], [0], [0], [1], [0, 0, 1, 1], [], []>} : vector<2x256xf32>, vector<256x512xf32>, vector<2x512xf32> -> vector<2x512xf32>
    %c0_3 = arith.constant 0 : index
    %c0_4 = arith.constant 0 : index
    %3 = vector.load %arg3[%c0_3, %c0_4] : memref<1x512xf32, #tpu.memory_space<vmem>>, vector<1x512xf32>
    %4 = vector.broadcast %3 : vector<1x512xf32> to vector<2x512xf32>
    %5 = arith.addf %2, %4 : vector<2x512xf32>
    %6 = math.tanh %5 : vector<2x512xf32>
    %c0_5 = arith.constant 0 : index
    %c0_6 = arith.constant 0 : index
    %7 = vector.load %arg4[%c0_5, %c0_6] : memref<512x512xf32, #tpu.memory_space<vmem>>, vector<512x512xf32>
    %cst_7 = arith.constant dense<0.000000e+00> : vector<2x512xf32>
    %8 = tpu.matmul %6, %7, %cst_7 {dimension_numbers = #tpu.dot_dimension_numbers<[1], [0], [0], [1], [0, 0, 1, 1], [], []>} : vector<2x512xf32>, vector<512x512xf32>, vector<2x512xf32> -> vector<2x512xf32>
    %c0_8 = arith.constant 0 : index
    %c0_9 = arith.constant 0 : index
    %9 = vector.load %arg5[%c0_8, %c0_9] : memref<1x512xf32, #tpu.memory_space<vmem>>, vector<1x512xf32>
    %10 = vector.broadcast %9 : vector<1x512xf32> to vector<2x512xf32>
    %11 = arith.addf %8, %10 : vector<2x512xf32>
    %12 = math.tanh %11 : vector<2x512xf32>
    %13 = vector.extract_strided_slice %12 {offsets = [0, 0], sizes = [2, 128], strides = [1, 1]} : vector<2x512xf32> to vector<2x128xf32>
    %14 = vector.extract_strided_slice %12 {offsets = [0, 128], sizes = [2, 128], strides = [1, 1]} : vector<2x512xf32> to vector<2x128xf32>
    %15 = arith.maximumf %13, %14 : vector<2x128xf32>
    %16 = vector.extract_strided_slice %12 {offsets = [0, 256], sizes = [2, 128], strides = [1, 1]} : vector<2x512xf32> to vector<2x128xf32>
    %17 = vector.extract_strided_slice %12 {offsets = [0, 384], sizes = [2, 128], strides = [1, 1]} : vector<2x512xf32> to vector<2x128xf32>
    %18 = arith.maximumf %16, %17 : vector<2x128xf32>
    %19 = arith.maximumf %15, %18 : vector<2x128xf32>
    %c0_10 = arith.constant 0 : index
    %c0_11 = arith.constant 0 : index
    %20 = vector.load %arg6[%c0_10, %c0_11] : memref<128x128xf32, #tpu.memory_space<vmem>>, vector<128x128xf32>
    %cst_12 = arith.constant dense<0.000000e+00> : vector<2x128xf32>
    %21 = tpu.matmul %19, %20, %cst_12 {dimension_numbers = #tpu.dot_dimension_numbers<[1], [0], [0], [1], [0, 0, 1, 1], [], []>} : vector<2x128xf32>, vector<128x128xf32>, vector<2x128xf32> -> vector<2x128xf32>
    %c0_13 = arith.constant 0 : index
    %c0_14 = arith.constant 0 : index
    %22 = vector.load %arg7[%c0_13, %c0_14] : memref<1x128xf32, #tpu.memory_space<vmem>>, vector<1x128xf32>
    %23 = vector.broadcast %22 : vector<1x128xf32> to vector<2x128xf32>
    %24 = arith.addf %21, %23 : vector<2x128xf32>
    %c0_15 = arith.constant 0 : index
    %c0_16 = arith.constant 0 : index
    %25 = vector.load %arg8[%c0_15, %c0_16] : memref<128x256xf32, #tpu.memory_space<vmem>>, vector<128x256xf32>
    %cst_17 = arith.constant dense<0.000000e+00> : vector<2x256xf32>
    %26 = tpu.matmul %24, %25, %cst_17 {dimension_numbers = #tpu.dot_dimension_numbers<[1], [0], [0], [1], [0, 0, 1, 1], [], []>} : vector<2x128xf32>, vector<128x256xf32>, vector<2x256xf32> -> vector<2x256xf32>
    %c0_18 = arith.constant 0 : index
    %c0_19 = arith.constant 0 : index
    %27 = vector.load %arg9[%c0_18, %c0_19] : memref<1x256xf32, #tpu.memory_space<vmem>>, vector<1x256xf32>
    %28 = vector.broadcast %27 : vector<1x256xf32> to vector<2x256xf32>
    %29 = arith.addf %26, %28 : vector<2x256xf32>
    %30 = math.tanh %29 : vector<2x256xf32>
    %c0_20 = arith.constant 0 : index
    %c0_21 = arith.constant 0 : index
    %31 = vector.load %arg10[%c0_20, %c0_21] : memref<256x256xf32, #tpu.memory_space<vmem>>, vector<256x256xf32>
    %cst_22 = arith.constant dense<0.000000e+00> : vector<2x256xf32>
    %32 = tpu.matmul %30, %31, %cst_22 {dimension_numbers = #tpu.dot_dimension_numbers<[1], [0], [0], [1], [0, 0, 1, 1], [], []>} : vector<2x256xf32>, vector<256x256xf32>, vector<2x256xf32> -> vector<2x256xf32>
    %c0_23 = arith.constant 0 : index
    %c0_24 = arith.constant 0 : index
    %33 = vector.load %arg11[%c0_23, %c0_24] : memref<1x256xf32, #tpu.memory_space<vmem>>, vector<1x256xf32>
    %34 = vector.broadcast %33 : vector<1x256xf32> to vector<2x256xf32>
    %35 = arith.addf %32, %34 : vector<2x256xf32>
    %cst_25 = arith.constant 0.000000e+00 : f32
    %36 = vector.broadcast %cst_25 : f32 to vector<2x256xf32>
    %37 = arith.maximumf %35, %36 : vector<2x256xf32>
    %c0_26 = arith.constant 0 : index
    %c0_27 = arith.constant 0 : index
    %38 = vector.load %arg12[%c0_26, %c0_27] : memref<2x256xf32, #tpu.memory_space<vmem>>, vector<2x256xf32>
    tpu.vector_store %arg12[%c0_26, %c0_27], %37 {strides = array<i32>} : memref<2x256xf32, #tpu.memory_space<vmem>>, vector<2x256xf32>,
    return
  }
  func.func @transform_0(%arg0: i32) -> (i32, i32) {
    %c0_i32 = arith.constant 0 : i32
    %c0_i32_0 = arith.constant 0 : i32
    return %arg0, %c0_i32 : i32, i32
  }
  func.func @transform_1(%arg0: i32) -> (i32, i32) {
    %c0_i32 = arith.constant 0 : i32
    %c0_i32_0 = arith.constant 0 : i32
    %c0_i32_1 = arith.constant 0 : i32
    return %c0_i32, %c0_i32_0 : i32, i32
  }
  func.func @transform_2(%arg0: i32) -> (i32, i32) {
    %c0_i32 = arith.constant 0 : i32
    %c0_i32_0 = arith.constant 0 : i32
    %c0_i32_1 = arith.constant 0 : i32
    return %c0_i32, %c0_i32_0 : i32, i32
  }
  func.func @transform_3(%arg0: i32) -> (i32, i32) {
    %c0_i32 = arith.constant 0 : i32
    %c0_i32_0 = arith.constant 0 : i32
    %c0_i32_1 = arith.constant 0 : i32
    return %c0_i32, %c0_i32_0 : i32, i32
  }
  func.func @transform_4(%arg0: i32) -> (i32, i32) {
    %c0_i32 = arith.constant 0 : i32
    %c0_i32_0 = arith.constant 0 : i32
    %c0_i32_1 = arith.constant 0 : i32
    return %c0_i32, %c0_i32_0 : i32, i32
  }
  func.func @transform_5(%arg0: i32) -> (i32, i32) {
    %c0_i32 = arith.constant 0 : i32
    %c0_i32_0 = arith.constant 0 : i32
    %c0_i32_1 = arith.constant 0 : i32
    return %c0_i32, %c0_i32_0 : i32, i32
  }
  func.func @transform_6(%arg0: i32) -> (i32, i32) {
    %c0_i32 = arith.constant 0 : i32
    %c0_i32_0 = arith.constant 0 : i32
    %c0_i32_1 = arith.constant 0 : i32
    return %c0_i32, %c0_i32_0 : i32, i32
  }
  func.func @transform_7(%arg0: i32) -> (i32, i32) {
    %c0_i32 = arith.constant 0 : i32
    %c0_i32_0 = arith.constant 0 : i32
    %c0_i32_1 = arith.constant 0 : i32
    return %c0_i32, %c0_i32_0 : i32, i32
  }
  func.func @transform_8(%arg0: i32) -> (i32, i32) {
    %c0_i32 = arith.constant 0 : i32
    %c0_i32_0 = arith.constant 0 : i32
    %c0_i32_1 = arith.constant 0 : i32
    return %c0_i32, %c0_i32_0 : i32, i32
  }
  func.func @transform_9(%arg0: i32) -> (i32, i32) {
    %c0_i32 = arith.constant 0 : i32
    %c0_i32_0 = arith.constant 0 : i32
    %c0_i32_1 = arith.constant 0 : i32
    return %c0_i32, %c0_i32_0 : i32, i32
  }
  func.func @transform_10(%arg0: i32) -> (i32, i32) {
    %c0_i32 = arith.constant 0 : i32
    %c0_i32_0 = arith.constant 0 : i32
    %c0_i32_1 = arith.constant 0 : i32
    return %c0_i32, %c0_i32_0 : i32, i32
  }
  func.func @transform_11(%arg0: i32) -> (i32, i32) {
    %c0_i32 = arith.constant 0 : i32
    %c0_i32_0 = arith.constant 0 : i32
    return %arg0, %c0_i32 : i32, i32
  }
}

</mosaic_0001>

<llo_original>
// kernel: forward.1
$region0: #{forward.1}
  #allocation0 [shape = 'u32[]', space=smem, size = 0x4, offset = 0x4, fixed_abs, tag = 'smem constant byte address 0x4 - core index']
  #allocation1 [shape = 'u32[144,128]{1,0:T(1,128)}', space=vmem, size = 0x12000, scoped, tag = 'internal scratch']
  %s0 = inlined_call_operand.vmem [shape: f32[2,256], index: 0, kind: input, shape index: {}]
  %s1 = inlined_call_operand.hbm [shape: f32[256,512], index: 1, kind: input, shape index: {}]
  %s2 = inlined_call_operand.vmem [shape: f32[1,512], index: 2, kind: input, shape index: {}]
  %s3 = inlined_call_operand.hbm [shape: f32[512,512], index: 3, kind: input, shape index: {}]
  %s4 = inlined_call_operand.vmem [shape: f32[1,512], index: 4, kind: input, shape index: {}]
  %s5 = inlined_call_operand.hbm [shape: f32[128,128], index: 5, kind: input, shape index: {}]
  %s6 = inlined_call_operand.vmem [shape: f32[1,128], index: 6, kind: input, shape index: {}]
  %s7 = inlined_call_operand.vmem [shape: f32[128,256], index: 7, kind: input, shape index: {}]
  %s8 = inlined_call_operand.vmem [shape: f32[1,256], index: 8, kind: input, shape index: {}]
  %s9 = inlined_call_operand.hbm [shape: f32[256,256], index: 9, kind: input, shape index: {}]
  %s10 = inlined_call_operand.vmem [shape: f32[1,256], index: 10, kind: input, shape index: {}]
  %s11 = inlined_call_operand.vmem [shape: f32[2,256], index: 11, kind: output, shape index: {}]
  %s12 = sld [smem:[#allocation0]]
  $region70: #{forward.1} parent=0
    _
  %s14 = ssub.s32 1, %s12
  %s15 = scalar_select 0, %s14, %s12
  $region1: #{forward.1} parent=0
    #allocation2 [shape = 'u8[524288]{0}', space=vmem, size = 0x80000, scoped, tag = 'input window, operand 1, single buffered']
    #allocation3 [shape = 's32[1]{0}', space=sflag, size = 0x4, scoped, tag = 'scoped memory for forward.1']
    #allocation4 [shape = 'u8[1048576]{0}', space=vmem, size = 0x100000, scoped, tag = 'input window, operand 3, single buffered']
    #allocation5 [shape = 's32[1]{0}', space=sflag, size = 0x4, scoped, tag = 'scoped memory for forward.1']
    #allocation6 [shape = 'u8[65536]{0}', space=vmem, size = 0x10000, scoped, tag = 'input window, operand 5, single buffered']
    #allocation7 [shape = 'u8[262144]{0}', space=vmem, size = 0x40000, scoped, tag = 'input window, operand 9, single buffered']
    #allocation8 [shape = 's32[1]{0}', space=sflag, size = 0x4, scoped, tag = 'scoped memory for forward.1']
    %16 = vsyncpa [#allocation3], 0
    %17 = vsyncpa [#allocation5], 0
    %18 = vsyncpa [#allocation8], 0
    // Predicated region
    $region2: #{forward.1} parent=1 // pred_check
      _
    $region3: #{forward.1} parent=1 // pred_check_branch
      %20 = sbr.rel (0) target = $region5
    $region4: #{forward.1} parent=1 // pred_region
      _
    $region5: #{forward.1} parent=1 // pred_fallthru
      _
    // Predicated region
    $region6: #{forward.1} parent=1 // pred_check
      _
    $region7: #{forward.1} parent=1 // pred_check_branch
      %22 = sbr.rel (0) target = $region9
    $region8: #{forward.1} parent=1 // pred_region
      %s24 = ssub.s32 16384, 16384
      %25 = vsyncadd [#allocation3], %s24
      %s26 = sshll.u32 [#allocation2], 4
      %s27 = int_to_ptr.vmem [resolvable:$true] %s26
      %32 = dma.hbm_to_vmem [thread:$0]  %s1, 16384, %s27, [#allocation3], 512, 512, 32
    $region9: #{forward.1} parent=1 // pred_fallthru
      _
    // Predicated region
    $region10: #{forward.1} parent=1 // pred_check
      _
    $region11: #{forward.1} parent=1 // pred_check_branch
      %34 = sbr.rel (0) target = $region13
    $region12: #{forward.1} parent=1 // pred_region
      _
    $region13: #{forward.1} parent=1 // pred_fallthru
      _
    // Predicated region
    $region14: #{forward.1} parent=1 // pred_check
      _
    $region15: #{forward.1} parent=1 // pred_check_branch
      %36 = sbr.rel (0) target = $region17
    $region16: #{forward.1} parent=1 // pred_region
      %s38 = ssub.s32 32768, 32768
      %39 = vsyncadd [#allocation5], %s38
      %s40 = sshll.u32 [#allocation4], 4
      %s41 = int_to_ptr.vmem [resolvable:$true] %s40
      %46 = dma.hbm_to_vmem [thread:$0]  %s3, 32768, %s41, [#allocation5], 512, 512, 32
    $region17: #{forward.1} parent=1 // pred_fallthru
      _
    // Predicated region
    $region18: #{forward.1} parent=1 // pred_check
      _
    $region19: #{forward.1} parent=1 // pred_check_branch
      %48 = sbr.rel (0) target = $region21
    $region20: #{forward.1} parent=1 // pred_region
      _
    $region21: #{forward.1} parent=1 // pred_fallthru
      _
    // Predicated region
    $region22: #{forward.1} parent=1 // pred_check
      _
    $region23: #{forward.1} parent=1 // pred_check_branch
      %50 = sbr.rel (0) target = $region25
    $region24: #{forward.1} parent=1 // pred_region
      %s52 = ssub.s32 2048, 2048
      %53 = vsyncadd [#allocation5], %s52
      %s54 = sshll.u32 [#allocation6], 4
      %s55 = int_to_ptr.vmem [resolvable:$true] %s54
      %60 = dma.hbm_to_vmem [thread:$0]  %s5, 2048, %s55, [#allocation5], 128, 128, 8
    $region25: #{forward.1} parent=1 // pred_fallthru
      _
    // Predicated region
    $region26: #{forward.1} parent=1 // pred_check
      _
    $region27: #{forward.1} parent=1 // pred_check_branch
      %62 = sbr.rel (0) target = $region29
    $region28: #{forward.1} parent=1 // pred_region
      _
    $region29: #{forward.1} parent=1 // pred_fallthru
      _
    // Predicated region
    $region30: #{forward.1} parent=1 // pred_check
      _
    $region31: #{forward.1} parent=1 // pred_check_branch
      %64 = sbr.rel (0) target = $region33
    $region32: #{forward.1} parent=1 // pred_region
      _
    $region33: #{forward.1} parent=1 // pred_fallthru
      _
    // Predicated region
    $region34: #{forward.1} parent=1 // pred_check
      _
    $region35: #{forward.1} parent=1 // pred_check_branch
      %66 = sbr.rel (0) target = $region37
    $region36: #{forward.1} parent=1 // pred_region
      _
    $region37: #{forward.1} parent=1 // pred_fallthru
      _
    // Predicated region
    $region38: #{forward.1} parent=1 // pred_check
      _
    $region39: #{forward.1} parent=1 // pred_check_branch
      %68 = sbr.rel (0) target = $region41
    $region40: #{forward.1} parent=1 // pred_region
      %s70 = ssub.s32 8192, 8192
      %71 = vsyncadd [#allocation8], %s70
      %s72 = sshll.u32 [#allocation7], 4
      %s73 = int_to_ptr.vmem [resolvable:$true] %s72
      %78 = dma.hbm_to_vmem [thread:$0]  %s9, 8192, %s73, [#allocation8], 256, 256, 16
    $region41: #{forward.1} parent=1 // pred_fallthru
      _
    // Predicated region
    $region42: #{forward.1} parent=1 // pred_check
      _
    $region43: #{forward.1} parent=1 // pred_check_branch
      %80 = sbr.rel (0) target = $region45
    $region44: #{forward.1} parent=1 // pred_region
      _
    $region45: #{forward.1} parent=1 // pred_fallthru
      _
    // Predicated region
    $region46: #{forward.1} parent=1 // pred_check
      _
    $region47: #{forward.1} parent=1 // pred_check_branch
      %82 = sbr.rel (0) target = $region49
    $region48: #{forward.1} parent=1 // pred_region
      %83 = dma.done [#allocation3], 16384
    $region49: #{forward.1} parent=1 // pred_fallthru
      _
    // Predicated region
    $region50: #{forward.1} parent=1 // pred_check
      _
    $region51: #{forward.1} parent=1 // pred_check_branch
      %85 = sbr.rel (0) target = $region53
    $region52: #{forward.1} parent=1 // pred_region
      %86 = dma.done [#allocation5], 32768
    $region53: #{forward.1} parent=1 // pred_fallthru
      _
    // Predicated region
    $region54: #{forward.1} parent=1 // pred_check
      _
    $region55: #{forward.1} parent=1 // pred_check_branch
      %88 = sbr.rel (0) target = $region57
    $region56: #{forward.1} parent=1 // pred_region
      %89 = dma.done [#allocation5], 2048
    $region57: #{forward.1} parent=1 // pred_fallthru
      _
    // Predicated region
    $region58: #{forward.1} parent=1 // pred_check
      _
    $region59: #{forward.1} parent=1 // pred_check_branch
      %91 = sbr.rel (0) target = $region61
    $region60: #{forward.1} parent=1 // pred_region
      %92 = dma.done [#allocation8], 8192
    $region61: #{forward.1} parent=1 // pred_fallthru
      _
    %v93 = vld [vmem:[%s0] sm:$0xf]
    %v94 = vld [vmem:[#allocation2] sm:$0xff]
    %v95 = vld [vmem:[#allocation2 + $0x8] sm:$0xff]
    %v96 = vld [vmem:[#allocation2 + $0x10] sm:$0xff]
    %v97 = vld [vmem:[#allocation2 + $0x18] sm:$0xff]
    %v98 = vld [vmem:[#allocation2 + $0x20] sm:$0xff]
    %v99 = vld [vmem:[#allocation2 + $0x28] sm:$0xff]
    %v100 = vld [vmem:[#allocation2 + $0x30] sm:$0xff]
    %v101 = vld [vmem:[#allocation2 + $0x38] sm:$0xff]
    %v102 = vld [vmem:[#allocation2 + $0x40] sm:$0xff]
    %v103 = vld [vmem:[#allocation2 + $0x48] sm:$0xff]
    %v104 = vld [vmem:[#allocation2 + $0x50] sm:$0xff]
    %v105 = vld [vmem:[#allocation2 + $0x58] sm:$0xff]
    %v106 = vld [vmem:[#allocation2 + $0x60] sm:$0xff]
    %v107 = vld [vmem:[#allocation2 + $0x68] sm:$0xff]
    %v108 = vld [vmem:[#allocation2 + $0x70] sm:$0xff]
    %v109 = vld [vmem:[#allocation2 + $0x78] sm:$0xff]
    %v110 = vld [vmem:[#allocation2 + $0x80] sm:$0xff]
    %v111 = vld [vmem:[#allocation2 + $0x88] sm:$0xff]
    %v112 = vld [vmem:[#allocation2 + $0x90] sm:$0xff]
    %v113 = vld [vmem:[#allocation2 + $0x98] sm:$0xff]
    %v114 = vld [vmem:[#allocation2 + $0xa0] sm:$0xff]
    %v115 = vld [vmem:[#allocation2 + $0xa8] sm:$0xff]
    %v116 = vld [vmem:[#allocation2 + $0xb0] sm:$0xff]
    %v117 = vld [vmem:[#allocation2 + $0xb8] sm:$0xff]
    %v118 = vld [vmem:[#allocation2 + $0xc0] sm:$0xff]
    %v119 = vld [vmem:[#allocation2 + $0xc8] sm:$0xff]
    %v120 = vld [vmem:[#allocation2 + $0xd0] sm:$0xff]
    %v121 = vld [vmem:[#allocation2 + $0xd8] sm:$0xff]
    %v122 = vld [vmem:[#allocation2 + $0xe0] sm:$0xff]
    %v123 = vld [vmem:[#allocation2 + $0xe8] sm:$0xff]
    %v124 = vld [vmem:[#allocation2 + $0xf0] sm:$0xff]
    %v125 = vld [vmem:[#allocation2 + $0xf8] sm:$0xff]
    %v126 = vld [vmem:[#allocation2 + $0x100] sm:$0xff]
    %v127 = vld [vmem:[#allocation2 + $0x108] sm:$0xff]
    %v128 = vld [vmem:[#allocation2 + $0x110] sm:$0xff]
    %v129 = vld [vmem:[#allocation2 + $0x118] sm:$0xff]
    %v130 = vld [vmem:[#allocation2 + $0x120] sm:$0xff]
    %v131 = vld [vmem:[#allocation2 + $0x128] sm:$0xff]
    %v132 = vld [vmem:[#allocation2 + $0x130] sm:$0xff]
    %v133 = vld [vmem:[#allocation2 + $0x138] sm:$0xff]
    %v134 = vld [vmem:[#allocation2 + $0x140] sm:$0xff]
    %v135 = vld [vmem:[#allocation2 + $0x148] sm:$0xff]
    %v136 = vld [vmem:[#allocation2 + $0x150] sm:$0xff]
    %v137 = vld [vmem:[#allocation2 + $0x158] sm:$0xff]
    %v138 = vld [vmem:[#allocation2 + $0x160] sm:$0xff]
    %v139 = vld [vmem:[#allocation2 + $0x168] sm:$0xff]
    %v140 = vld [vmem:[#allocation2 + $0x170] sm:$0xff]
    %v141 = vld [vmem:[#allocation2 + $0x178] sm:$0xff]
    %v142 = vld [vmem:[#allocation2 + $0x180] sm:$0xff]
    %v143 = vld [vmem:[#allocation2 + $0x188] sm:$0xff]
    %v144 = vld [vmem:[#allocation2 + $0x190] sm:$0xff]
    %v145 = vld [vmem:[#allocation2 + $0x198] sm:$0xff]
    %v146 = vld [vmem:[#allocation2 + $0x1a0] sm:$0xff]
    %v147 = vld [vmem:[#allocation2 + $0x1a8] sm:$0xff]
    %v148 = vld [vmem:[#allocation2 + $0x1b0] sm:$0xff]
    %v149 = vld [vmem:[#allocation2 + $0x1b8] sm:$0xff]
    %v150 = vld [vmem:[#allocation2 + $0x1c0] sm:$0xff]
    %v151 = vld [vmem:[#allocation2 + $0x1c8] sm:$0xff]
    %v152 = vld [vmem:[#allocation2 + $0x1d0] sm:$0xff]
    %v153 = vld [vmem:[#allocation2 + $0x1d8] sm:$0xff]
    %v154 = vld [vmem:[#allocation2 + $0x1e0] sm:$0xff]
    %v155 = vld [vmem:[#allocation2 + $0x1e8] sm:$0xff]
    %v156 = vld [vmem:[#allocation2 + $0x1f0] sm:$0xff]
    %v157 = vld [vmem:[#allocation2 + $0x1f8] sm:$0xff]
    %v158 = vld [vmem:[#allocation2 + $0x200] sm:$0xff]
    %v159 = vld [vmem:[#allocation2 + $0x208] sm:$0xff]
    %v160 = vld [vmem:[#allocation2 + $0x210] sm:$0xff]
    %v161 = vld [vmem:[#allocation2 + $0x218] sm:$0xff]
    %v162 = vld [vmem:[#allocation2 + $0x220] sm:$0xff]
    %v163 = vld [vmem:[#allocation2 + $0x228] sm:$0xff]
    %v164 = vld [vmem:[#allocation2 + $0x230] sm:$0xff]
    %v165 = vld [vmem:[#allocation2 + $0x238] sm:$0xff]
    %v166 = vld [vmem:[#allocation2 + $0x240] sm:$0xff]
    %v167 = vld [vmem:[#allocation2 + $0x248] sm:$0xff]
    %v168 = vld [vmem:[#allocation2 + $0x250] sm:$0xff]
    %v169 = vld [vmem:[#allocation2 + $0x258] sm:$0xff]
    %v170 = vld [vmem:[#allocation2 + $0x260] sm:$0xff]
    %v171 = vld [vmem:[#allocation2 + $0x268] sm:$0xff]
    %v172 = vld [vmem:[#allocation2 + $0x270] sm:$0xff]
    %v173 = vld [vmem:[#allocation2 + $0x278] sm:$0xff]
    %v174 = vld [vmem:[#allocation2 + $0x280] sm:$0xff]
    %v175 = vld [vmem:[#allocation2 + $0x288] sm:$0xff]
    %v176 = vld [vmem:[#allocation2 + $0x290] sm:$0xff]
    %v177 = vld [vmem:[#allocation2 + $0x298] sm:$0xff]
    %v178 = vld [vmem:[#allocation2 + $0x2a0] sm:$0xff]
    %v179 = vld [vmem:[#allocation2 + $0x2a8] sm:$0xff]
    %v180 = vld [vmem:[#allocation2 + $0x2b0] sm:$0xff]
    %v181 = vld [vmem:[#allocation2 + $0x2b8] sm:$0xff]
    %v182 = vld [vmem:[#allocation2 + $0x2c0] sm:$0xff]
    %v183 = vld [vmem:[#allocation2 + $0x2c8] sm:$0xff]
    %v184 = vld [vmem:[#allocation2 + $0x2d0] sm:$0xff]
    %v185 = vld [vmem:[#allocation2 + $0x2d8] sm:$0xff]
    %v186 = vld [vmem:[#allocation2 + $0x2e0] sm:$0xff]
    %v187 = vld [vmem:[#allocation2 + $0x2e8] sm:$0xff]
    %v188 = vld [vmem:[#allocation2 + $0x2f0] sm:$0xff]
    %v189 = vld [vmem:[#allocation2 + $0x2f8] sm:$0xff]
    %v190 = vld [vmem:[#allocation2 + $0x300] sm:$0xff]
    %v191 = vld [vmem:[#allocation2 + $0x308] sm:$0xff]
    %v192 = vld [vmem:[#allocation2 + $0x310] sm:$0xff]
    %v193 = vld [vmem:[#allocation2 + $0x318] sm:$0xff]
    %v194 = vld [vmem:[#allocation2 + $0x320] sm:$0xff]
    %v195 = vld [vmem:[#allocation2 + $0x328] sm:$0xff]
    %v196 = vld [vmem:[#allocation2 + $0x330] sm:$0xff]
    %v197 = vld [vmem:[#allocation2 + $0x338] sm:$0xff]
    %v198 = vld [vmem:[#allocation2 + $0x340] sm:$0xff]
    %v199 = vld [vmem:[#allocation2 + $0x348] sm:$0xff]
    %v200 = vld [vmem:[#allocation2 + $0x350] sm:$0xff]
    %v201 = vld [vmem:[#allocation2 + $0x358] sm:$0xff]
    %v202 = vld [vmem:[#allocation2 + $0x360] sm:$0xff]
    %v203 = vld [vmem:[#allocation2 + $0x368] sm:$0xff]
    %v204 = vld [vmem:[#allocation2 + $0x370] sm:$0xff]
    %v205 = vld [vmem:[#allocation2 + $0x378] sm:$0xff]
    %v206 = vld [vmem:[#allocation2 + $0x380] sm:$0xff]
    %v207 = vld [vmem:[#allocation2 + $0x388] sm:$0xff]
    %v208 = vld [vmem:[#allocation2 + $0x390] sm:$0xff]
    %v209 = vld [vmem:[#allocation2 + $0x398] sm:$0xff]
    %v210 = vld [vmem:[#allocation2 + $0x3a0] sm:$0xff]
    %v211 = vld [vmem:[#allocation2 + $0x3a8] sm:$0xff]
    %v212 = vld [vmem:[#allocation2 + $0x3b0] sm:$0xff]
    %v213 = vld [vmem:[#allocation2 + $0x3b8] sm:$0xff]
    %v214 = vld [vmem:[#allocation2 + $0x3c0] sm:$0xff]
    %v215 = vld [vmem:[#allocation2 + $0x3c8] sm:$0xff]
    %v216 = vld [vmem:[#allocation2 + $0x3d0] sm:$0xff]
    %v217 = vld [vmem:[#allocation2 + $0x3d8] sm:$0xff]
    %v218 = vld [vmem:[#allocation2 + $0x3e0] sm:$0xff]
    %v219 = vld [vmem:[#allocation2 + $0x3e8] sm:$0xff]
    %v220 = vld [vmem:[#allocation2 + $0x3f0] sm:$0xff]
    %v221 = vld [vmem:[#allocation2 + $0x3f8] sm:$0xff]
    %v222 = vld [vmem:[%s2] sm:$0xf]
    %v224 = vlaneseq
    %v225 = vshrl.u32 %v224, 7
    %v226 = vsub.s32 0, %v225
    %v227 = vrot.slane %v222, %v226
    %v228 = vlaneseq
    %v229 = vshrl.u32 %v228, 7
    %v230 = vsub.s32 1, %v229
    %v231 = vrot.slane %v222, %v230
    %v232 = vlaneseq
    %v233 = vshrl.u32 %v232, 7
    %v234 = vsub.s32 2, %v233
    %v235 = vrot.slane %v222, %v234
    %v236 = vlaneseq
    %v237 = vshrl.u32 %v236, 7
    %v238 = vsub.s32 3, %v237
    %v239 = vrot.slane %v222, %v238
    %v246 = vunpack.c.l.s4 1983009808
    %v247 = vunpack.c.0.s8 %v246
    %v248 = vlaneseq
    %v249 = vshrl.u32 %v248, 7
    %v250 = vsub.s32 %v247, %v249
    %v251 = vrot.slane %v93, %v250
    %v252 = vcombine.high %v251, %v251
    %255 = vmatprep.subr.mxu0 %v95
    %256 = vmatpush1.msra.mxu0 %v94
    %257 = vmatprep.subr.mxu0 %v99
    %258 = vmatpush1.msra.mxu0 %v98
    %259 = vmatprep.subr.mxu0 %v103
    %260 = vmatpush1.msra.mxu0 %v102
    %261 = vmatprep.subr.mxu0 %v107
    %262 = vmatpush1.msra.mxu0 %v106
    %263 = vmatprep.subr.mxu0 %v111
    %264 = vmatpush1.msra.mxu0 %v110
    %265 = vmatprep.subr.mxu0 %v115
    %266 = vmatpush1.msra.mxu0 %v114
    %267 = vmatprep.subr.mxu0 %v119
    %268 = vmatpush1.msra.mxu0 %v118
    %269 = vmatprep.subr.mxu0 %v123
    %270 = vmatpush1.msra.mxu0 %v122
    %271 = vmatprep.subr.mxu0 %v127
    %272 = vmatpush1.msra.mxu0 %v126
    %273 = vmatprep.subr.mxu0 %v131
    %274 = vmatpush1.msra.mxu0 %v130
    %275 = vmatprep.subr.mxu0 %v135
    %276 = vmatpush1.msra.mxu0 %v134
    %277 = vmatprep.subr.mxu0 %v139
    %278 = vmatpush1.msra.mxu0 %v138
    %279 = vmatprep.subr.mxu0 %v143
    %280 = vmatpush1.msra.mxu0 %v142
    %281 = vmatprep.subr.mxu0 %v147
    %282 = vmatpush1.msra.mxu0 %v146
    %283 = vmatprep.subr.mxu0 %v151
    %284 = vmatpush1.msra.mxu0 %v150
    %285 = vmatprep.subr.mxu0 %v155
    %286 = vmatpush1.msra.mxu0 %v154
    %287 = vmatprep.subr.mxu0 %v159
    %288 = vmatpush1.msra.mxu0 %v158
    %289 = vmatprep.subr.mxu0 %v163
    %290 = vmatpush1.msra.mxu0 %v162
    %291 = vmatprep.subr.mxu0 %v167
    %292 = vmatpush1.msra.mxu0 %v166
    %293 = vmatprep.subr.mxu0 %v171
    %294 = vmatpush1.msra.mxu0 %v170
    %295 = vmatprep.subr.mxu0 %v175
    %296 = vmatpush1.msra.mxu0 %v174
    %297 = vmatprep.subr.mxu0 %v179
    %298 = vmatpush1.msra.mxu0 %v178
    %299 = vmatprep.subr.mxu0 %v183
    %300 = vmatpush1.msra.mxu0 %v182
    %301 = vmatprep.subr.mxu0 %v187
    %302 = vmatpush1.msra.mxu0 %v186
    %303 = vmatprep.subr.mxu0 %v191
    %304 = vmatpush1.msra.mxu0 %v190
    %305 = vmatprep.subr.mxu0 %v195
    %306 = vmatpush1.msra.mxu0 %v194
    %307 = vmatprep.subr.mxu0 %v199
    %308 = vmatpush1.msra.mxu0 %v198
    %309 = vmatprep.subr.mxu0 %v203
    %310 = vmatpush1.msra.mxu0 %v202
    %311 = vmatprep.subr.mxu0 %v207
    %312 = vmatpush1.msra.mxu0 %v206
    %313 = vmatprep.subr.mxu0 %v211
    %314 = vmatpush1.msra.mxu0 %v210
    %315 = vmatprep.subr.mxu0 %v215
    %316 = vmatpush1.msra.mxu0 %v214
    %317 = vmatprep.subr.mxu0 %v219
    %318 = vmatpush1.msra.mxu0 %v218
    %319 = vmatprep.mubr.f32.mxu0 %v252
    %320 = vmatmul.mubr.f32.gmra.mrb[0].mxu0 %v251
    %v321 = vpop.f32.mrb[0].mxu0
    %v322 = vadd.f32 %v227, %v321
    %v323 = vpop.f32.mrb[0].mxu0
    %v324 = vadd.f32 %v231, %v323
    %325 = vdwg.mxu0
    %326 = vmatprep.subr.mxu0 %v97
    %327 = vmatpush1.msra.mxu0 %v96
    %328 = vmatprep.subr.mxu0 %v101
    %329 = vmatpush1.msra.mxu0 %v100
    %330 = vmatprep.subr.mxu0 %v105
    %331 = vmatpush1.msra.mxu0 %v104
    %332 = vmatprep.subr.mxu0 %v109
    %333 = vmatpush1.msra.mxu0 %v108
    %334 = vmatprep.subr.mxu0 %v113
    %335 = vmatpush1.msra.mxu0 %v112
    %336 = vmatprep.subr.mxu0 %v117
    %337 = vmatpush1.msra.mxu0 %v116
    %338 = vmatprep.subr.mxu0 %v121
    %339 = vmatpush1.msra.mxu0 %v120
    %340 = vmatprep.subr.mxu0 %v125
    %341 = vmatpush1.msra.mxu0 %v124
    %342 = vmatprep.subr.mxu0 %v129
    %343 = vmatpush1.msra.mxu0 %v128
    %344 = vmatprep.subr.mxu0 %v133
    %345 = vmatpush1.msra.mxu0 %v132
    %346 = vmatprep.subr.mxu0 %v137
    %347 = vmatpush1.msra.mxu0 %v136
    %348 = vmatprep.subr.mxu0 %v141
    %349 = vmatpush1.msra.mxu0 %v140
    %350 = vmatprep.subr.mxu0 %v145
    %351 = vmatpush1.msra.mxu0 %v144
    %352 = vmatprep.subr.mxu0 %v149
    %353 = vmatpush1.msra.mxu0 %v148
    %354 = vmatprep.subr.mxu0 %v153
    %355 = vmatpush1.msra.mxu0 %v152
    %356 = vmatprep.subr.mxu0 %v157
    %357 = vmatpush1.msra.mxu0 %v156
    %358 = vmatprep.subr.mxu0 %v161
    %359 = vmatpush1.msra.mxu0 %v160
    %360 = vmatprep.subr.mxu0 %v165
    %361 = vmatpush1.msra.mxu0 %v164
    %362 = vmatprep.subr.mxu0 %v169
    %363 = vmatpush1.msra.mxu0 %v168
    %364 = vmatprep.subr.mxu0 %v173
    %365 = vmatpush1.msra.mxu0 %v172
    %366 = vmatprep.subr.mxu0 %v177
    %367 = vmatpush1.msra.mxu0 %v176
    %368 = vmatprep.subr.mxu0 %v181
    %369 = vmatpush1.msra.mxu0 %v180
    %370 = vmatprep.subr.mxu0 %v185
    %371 = vmatpush1.msra.mxu0 %v184
    %372 = vmatprep.subr.mxu0 %v189
    %373 = vmatpush1.msra.mxu0 %v188
    %374 = vmatprep.subr.mxu0 %v193
    %375 = vmatpush1.msra.mxu0 %v192
    %376 = vmatprep.subr.mxu0 %v197
    %377 = vmatpush1.msra.mxu0 %v196
    %378 = vmatprep.subr.mxu0 %v201
    %379 = vmatpush1.msra.mxu0 %v200
    %380 = vmatprep.subr.mxu0 %v205
    %381 = vmatpush1.msra.mxu0 %v204
    %382 = vmatprep.subr.mxu0 %v209
    %383 = vmatpush1.msra.mxu0 %v208
    %384 = vmatprep.subr.mxu0 %v213
    %385 = vmatpush1.msra.mxu0 %v212
    %386 = vmatprep.subr.mxu0 %v217
    %387 = vmatpush1.msra.mxu0 %v216
    %388 = vmatprep.subr.mxu0 %v221
    %389 = vmatpush1.msra.mxu0 %v220
    %390 = vmatprep.mubr.f32.mxu0 %v252
    %391 = vmatmul.mubr.f32.gmra.mrb[0].mxu0 %v251
    %v392 = vpop.f32.mrb[0].mxu0
    %v393 = vadd.f32 %v235, %v392
    %v394 = vpop.f32.mrb[0].mxu0
    %v395 = vadd.f32 %v239, %v394
    %396 = vdwg.mxu0
    %v397 = vtanh.pop %v322
    %v398 = vtanh.pop %v324
    %v399 = vtanh.pop %v393
    %v400 = vtanh.pop %v395
    %v401 = vld [vmem:[#allocation4] sm:$0xff]
    %v402 = vld [vmem:[#allocation4 + $0x8] sm:$0xff]
    %v403 = vld [vmem:[#allocation4 + $0x10] sm:$0xff]
    %v404 = vld [vmem:[#allocation4 + $0x18] sm:$0xff]
    %v405 = vld [vmem:[#allocation4 + $0x20] sm:$0xff]
    %v406 = vld [vmem:[#allocation4 + $0x28] sm:$0xff]
    %v407 = vld [vmem:[#allocation4 + $0x30] sm:$0xff]
    %v408 = vld [vmem:[#allocation4 + $0x38] sm:$0xff]
    %v409 = vld [vmem:[#allocation4 + $0x40] sm:$0xff]
    %v410 = vld [vmem:[#allocation4 + $0x48] sm:$0xff]
    %v411 = vld [vmem:[#allocation4 + $0x50] sm:$0xff]
    %v412 = vld [vmem:[#allocation4 + $0x58] sm:$0xff]
    %v413 = vld [vmem:[#allocation4 + $0x60] sm:$0xff]
    %v414 = vld [vmem:[#allocation4 + $0x68] sm:$0xff]
    %v415 = vld [vmem:[#allocation4 + $0x70] sm:$0xff]
    %v416 = vld [vmem:[#allocation4 + $0x78] sm:$0xff]
    %v417 = vld [vmem:[#allocation4 + $0x80] sm:$0xff]
    %v418 = vld [vmem:[#allocation4 + $0x88] sm:$0xff]
    %v419 = vld [vmem:[#allocation4 + $0x90] sm:$0xff]
    %v420 = vld [vmem:[#allocation4 + $0x98] sm:$0xff]
    %v421 = vld [vmem:[#allocation4 + $0xa0] sm:$0xff]
    %v422 = vld [vmem:[#allocation4 + $0xa8] sm:$0xff]
    %v423 = vld [vmem:[#allocation4 + $0xb0] sm:$0xff]
    %v424 = vld [vmem:[#allocation4 + $0xb8] sm:$0xff]
    %v425 = vld [vmem:[#allocation4 + $0xc0] sm:$0xff]
    %v426 = vld [vmem:[#allocation4 + $0xc8] sm:$0xff]
    %v427 = vld [vmem:[#allocation4 + $0xd0] sm:$0xff]
    %v428 = vld [vmem:[#allocation4 + $0xd8] sm:$0xff]
    %v429 = vld [vmem:[#allocation4 + $0xe0] sm:$0xff]
    %v430 = vld [vmem:[#allocation4 + $0xe8] sm:$0xff]
    %v431 = vld [vmem:[#allocation4 + $0xf0] sm:$0xff]
    %v432 = vld [vmem:[#allocation4 + $0xf8] sm:$0xff]
    %v433 = vld [vmem:[#allocation4 + $0x100] sm:$0xff]
    %v434 = vld [vmem:[#allocation4 + $0x108] sm:$0xff]
    %v435 = vld [vmem:[#allocation4 + $0x110] sm:$0xff]
    %v436 = vld [vmem:[#allocation4 + $0x118] sm:$0xff]
    %v437 = vld [vmem:[#allocation4 + $0x120] sm:$0xff]
    %v438 = vld [vmem:[#allocation4 + $0x128] sm:$0xff]
    %v439 = vld [vmem:[#allocation4 + $0x130] sm:$0xff]
    %v440 = vld [vmem:[#allocation4 + $0x138] sm:$0xff]
    %v441 = vld [vmem:[#allocation4 + $0x140] sm:$0xff]
    %v442 = vld [vmem:[#allocation4 + $0x148] sm:$0xff]
    %v443 = vld [vmem:[#allocation4 + $0x150] sm:$0xff]
    %v444 = vld [vmem:[#allocation4 + $0x158] sm:$0xff]
    %v445 = vld [vmem:[#allocation4 + $0x160] sm:$0xff]
    %v446 = vld [vmem:[#allocation4 + $0x168] sm:$0xff]
    %v447 = vld [vmem:[#allocation4 + $0x170] sm:$0xff]
    %v448 = vld [vmem:[#allocation4 + $0x178] sm:$0xff]
    %v449 = vld [vmem:[#allocation4 + $0x180] sm:$0xff]
    %v450 = vld [vmem:[#allocation4 + $0x188] sm:$0xff]
    %v451 = vld [vmem:[#allocation4 + $0x190] sm:$0xff]
    %v452 = vld [vmem:[#allocation4 + $0x198] sm:$0xff]
    %v453 = vld [vmem:[#allocation4 + $0x1a0] sm:$0xff]
    %v454 = vld [vmem:[#allocation4 + $0x1a8] sm:$0xff]
    %v455 = vld [vmem:[#allocation4 + $0x1b0] sm:$0xff]
    %v456 = vld [vmem:[#allocation4 + $0x1b8] sm:$0xff]
    %v457 = vld [vmem:[#allocation4 + $0x1c0] sm:$0xff]
    %v458 = vld [vmem:[#allocation4 + $0x1c8] sm:$0xff]
    %v459 = vld [vmem:[#allocation4 + $0x1d0] sm:$0xff]
    %v460 = vld [vmem:[#allocation4 + $0x1d8] sm:$0xff]
    %v461 = vld [vmem:[#allocation4 + $0x1e0] sm:$0xff]
    %v462 = vld [vmem:[#allocation4 + $0x1e8] sm:$0xff]
    %v463 = vld [vmem:[#allocation4 + $0x1f0] sm:$0xff]
    %v464 = vld [vmem:[#allocation4 + $0x1f8] sm:$0xff]
    %v465 = vld [vmem:[#allocation4 + $0x200] sm:$0xff]
    %v466 = vld [vmem:[#allocation4 + $0x208] sm:$0xff]
    %v467 = vld [vmem:[#allocation4 + $0x210] sm:$0xff]
    %v468 = vld [vmem:[#allocation4 + $0x218] sm:$0xff]
    %v469 = vld [vmem:[#allocation4 + $0x220] sm:$0xff]
    %v470 = vld [vmem:[#allocation4 + $0x228] sm:$0xff]
    %v471 = vld [vmem:[#allocation4 + $0x230] sm:$0xff]
    %v472 = vld [vmem:[#allocation4 + $0x238] sm:$0xff]
    %v473 = vld [vmem:[#allocation4 + $0x240] sm:$0xff]
    %v474 = vld [vmem:[#allocation4 + $0x248] sm:$0xff]
    %v475 = vld [vmem:[#allocation4 + $0x250] sm:$0xff]
    %v476 = vld [vmem:[#allocation4 + $0x258] sm:$0xff]
    %v477 = vld [vmem:[#allocation4 + $0x260] sm:$0xff]
    %v478 = vld [vmem:[#allocation4 + $0x268] sm:$0xff]
    %v479 = vld [vmem:[#allocation4 + $0x270] sm:$0xff]
    %v480 = vld [vmem:[#allocation4 + $0x278] sm:$0xff]
    %v481 = vld [vmem:[#allocation4 + $0x280] sm:$0xff]
    %v482 = vld [vmem:[#allocation4 + $0x288] sm:$0xff]
    %v483 = vld [vmem:[#allocation4 + $0x290] sm:$0xff]
    %v484 = vld [vmem:[#allocation4 + $0x298] sm:$0xff]
    %v485 = vld [vmem:[#allocation4 + $0x2a0] sm:$0xff]
    %v486 = vld [vmem:[#allocation4 + $0x2a8] sm:$0xff]
    %v487 = vld [vmem:[#allocation4 + $0x2b0] sm:$0xff]
    %v488 = vld [vmem:[#allocation4 + $0x2b8] sm:$0xff]
    %v489 = vld [vmem:[#allocation4 + $0x2c0] sm:$0xff]
    %v490 = vld [vmem:[#allocation4 + $0x2c8] sm:$0xff]
    %v491 = vld [vmem:[#allocation4 + $0x2d0] sm:$0xff]
    %v492 = vld [vmem:[#allocation4 + $0x2d8] sm:$0xff]
    %v493 = vld [vmem:[#allocation4 + $0x2e0] sm:$0xff]
    %v494 = vld [vmem:[#allocation4 + $0x2e8] sm:$0xff]
    %v495 = vld [vmem:[#allocation4 + $0x2f0] sm:$0xff]
    %v496 = vld [vmem:[#allocation4 + $0x2f8] sm:$0xff]
    %v497 = vld [vmem:[#allocation4 + $0x300] sm:$0xff]
    %v498 = vld [vmem:[#allocation4 + $0x308] sm:$0xff]
    %v499 = vld [vmem:[#allocation4 + $0x310] sm:$0xff]
    %v500 = vld [vmem:[#allocation4 + $0x318] sm:$0xff]
    %v501 = vld [vmem:[#allocation4 + $0x320] sm:$0xff]
    %v502 = vld [vmem:[#allocation4 + $0x328] sm:$0xff]
    %v503 = vld [vmem:[#allocation4 + $0x330] sm:$0xff]
    %v504 = vld [vmem:[#allocation4 + $0x338] sm:$0xff]
    %v505 = vld [vmem:[#allocation4 + $0x340] sm:$0xff]
    %v506 = vld [vmem:[#allocation4 + $0x348] sm:$0xff]
    %v507 = vld [vmem:[#allocation4 + $0x350] sm:$0xff]
    %v508 = vld [vmem:[#allocation4 + $0x358] sm:$0xff]
    %v509 = vld [vmem:[#allocation4 + $0x360] sm:$0xff]
    %v510 = vld [vmem:[#allocation4 + $0x368] sm:$0xff]
    %v511 = vld [vmem:[#allocation4 + $0x370] sm:$0xff]
    %v512 = vld [vmem:[#allocation4 + $0x378] sm:$0xff]
    %v513 = vld [vmem:[#allocation4 + $0x380] sm:$0xff]
    %v514 = vld [vmem:[#allocation4 + $0x388] sm:$0xff]
    %v515 = vld [vmem:[#allocation4 + $0x390] sm:$0xff]
    %v516 = vld [vmem:[#allocation4 + $0x398] sm:$0xff]
    %v517 = vld [vmem:[#allocation4 + $0x3a0] sm:$0xff]
    %v518 = vld [vmem:[#allocation4 + $0x3a8] sm:$0xff]
    %v519 = vld [vmem:[#allocation4 + $0x3b0] sm:$0xff]
    %v520 = vld [vmem:[#allocation4 + $0x3b8] sm:$0xff]
    %v521 = vld [vmem:[#allocation4 + $0x3c0] sm:$0xff]
    %v522 = vld [vmem:[#allocation4 + $0x3c8] sm:$0xff]
    %v523 = vld [vmem:[#allocation4 + $0x3d0] sm:$0xff]
    %v524 = vld [vmem:[#allocation4 + $0x3d8] sm:$0xff]
    %v525 = vld [vmem:[#allocation4 + $0x3e0] sm:$0xff]
    %v526 = vld [vmem:[#allocation4 + $0x3e8] sm:$0xff]
    %v527 = vld [vmem:[#allocation4 + $0x3f0] sm:$0xff]
    %v528 = vld [vmem:[#allocation4 + $0x3f8] sm:$0xff]
    %v529 = vld [vmem:[#allocation4 + $0x400] sm:$0xff]
    %v530 = vld [vmem:[#allocation4 + $0x408] sm:$0xff]
    %v531 = vld [vmem:[#allocation4 + $0x410] sm:$0xff]
    %v532 = vld [vmem:[#allocation4 + $0x418] sm:$0xff]
    %v533 = vld [vmem:[#allocation4 + $0x420] sm:$0xff]
    %v534 = vld [vmem:[#allocation4 + $0x428] sm:$0xff]
    %v535 = vld [vmem:[#allocation4 + $0x430] sm:$0xff]
    %v536 = vld [vmem:[#allocation4 + $0x438] sm:$0xff]
    %v537 = vld [vmem:[#allocation4 + $0x440] sm:$0xff]
    %v538 = vld [vmem:[#allocation4 + $0x448] sm:$0xff]
    %v539 = vld [vmem:[#allocation4 + $0x450] sm:$0xff]
    %v540 = vld [vmem:[#allocation4 + $0x458] sm:$0xff]
    %v541 = vld [vmem:[#allocation4 + $0x460] sm:$0xff]
    %v542 = vld [vmem:[#allocation4 + $0x468] sm:$0xff]
    %v543 = vld [vmem:[#allocation4 + $0x470] sm:$0xff]
    %v544 = vld [vmem:[#allocation4 + $0x478] sm:$0xff]
    %v545 = vld [vmem:[#allocation4 + $0x480] sm:$0xff]
    %v546 = vld [vmem:[#allocation4 + $0x488] sm:$0xff]
    %v547 = vld [vmem:[#allocation4 + $0x490] sm:$0xff]
    %v548 = vld [vmem:[#allocation4 + $0x498] sm:$0xff]
    %v549 = vld [vmem:[#allocation4 + $0x4a0] sm:$0xff]
    %v550 = vld [vmem:[#allocation4 + $0x4a8] sm:$0xff]
    %v551 = vld [vmem:[#allocation4 + $0x4b0] sm:$0xff]
    %v552 = vld [vmem:[#allocation4 + $0x4b8] sm:$0xff]
    %v553 = vld [vmem:[#allocation4 + $0x4c0] sm:$0xff]
    %v554 = vld [vmem:[#allocation4 + $0x4c8] sm:$0xff]
    %v555 = vld [vmem:[#allocation4 + $0x4d0] sm:$0xff]
    %v556 = vld [vmem:[#allocation4 + $0x4d8] sm:$0xff]
    %v557 = vld [vmem:[#allocation4 + $0x4e0] sm:$0xff]
    %v558 = vld [vmem:[#allocation4 + $0x4e8] sm:$0xff]
    %v559 = vld [vmem:[#allocation4 + $0x4f0] sm:$0xff]
    %v560 = vld [vmem:[#allocation4 + $0x4f8] sm:$0xff]
    %v561 = vld [vmem:[#allocation4 + $0x500] sm:$0xff]
    %v562 = vld [vmem:[#allocation4 + $0x508] sm:$0xff]
    %v563 = vld [vmem:[#allocation4 + $0x510] sm:$0xff]
    %v564 = vld [vmem:[#allocation4 + $0x518] sm:$0xff]
    %v565 = vld [vmem:[#allocation4 + $0x520] sm:$0xff]
    %v566 = vld [vmem:[#allocation4 + $0x528] sm:$0xff]
    %v567 = vld [vmem:[#allocation4 + $0x530] sm:$0xff]
    %v568 = vld [vmem:[#allocation4 + $0x538] sm:$0xff]
    %v569 = vld [vmem:[#allocation4 + $0x540] sm:$0xff]
    %v570 = vld [vmem:[#allocation4 + $0x548] sm:$0xff]
    %v571 = vld [vmem:[#allocation4 + $0x550] sm:$0xff]
    %v572 = vld [vmem:[#allocation4 + $0x558] sm:$0xff]
    %v573 = vld [vmem:[#allocation4 + $0x560] sm:$0xff]
    %v574 = vld [vmem:[#allocation4 + $0x568] sm:$0xff]
    %v575 = vld [vmem:[#allocation4 + $0x570] sm:$0xff]
    %v576 = vld [vmem:[#allocation4 + $0x578] sm:$0xff]
    %v577 = vld [vmem:[#allocation4 + $0x580] sm:$0xff]
    %v578 = vld [vmem:[#allocation4 + $0x588] sm:$0xff]
    %v579 = vld [vmem:[#allocation4 + $0x590] sm:$0xff]
    %v580 = vld [vmem:[#allocation4 + $0x598] sm:$0xff]
    %v581 = vld [vmem:[#allocation4 + $0x5a0] sm:$0xff]
    %v582 = vld [vmem:[#allocation4 + $0x5a8] sm:$0xff]
    %v583 = vld [vmem:[#allocation4 + $0x5b0] sm:$0xff]
    %v584 = vld [vmem:[#allocation4 + $0x5b8] sm:$0xff]
    %v585 = vld [vmem:[#allocation4 + $0x5c0] sm:$0xff]
    %v586 = vld [vmem:[#allocation4 + $0x5c8] sm:$0xff]
    %v587 = vld [vmem:[#allocation4 + $0x5d0] sm:$0xff]
    %v588 = vld [vmem:[#allocation4 + $0x5d8] sm:$0xff]
    %v589 = vld [vmem:[#allocation4 + $0x5e0] sm:$0xff]
    %v590 = vld [vmem:[#allocation4 + $0x5e8] sm:$0xff]
    %v591 = vld [vmem:[#allocation4 + $0x5f0] sm:$0xff]
    %v592 = vld [vmem:[#allocation4 + $0x5f8] sm:$0xff]
    %v593 = vld [vmem:[#allocation4 + $0x600] sm:$0xff]
    %v594 = vld [vmem:[#allocation4 + $0x608] sm:$0xff]
    %v595 = vld [vmem:[#allocation4 + $0x610] sm:$0xff]
    %v596 = vld [vmem:[#allocation4 + $0x618] sm:$0xff]
    %v597 = vld [vmem:[#allocation4 + $0x620] sm:$0xff]
    %v598 = vld [vmem:[#allocation4 + $0x628] sm:$0xff]
    %v599 = vld [vmem:[#allocation4 + $0x630] sm:$0xff]
    %v600 = vld [vmem:[#allocation4 + $0x638] sm:$0xff]
    %v601 = vld [vmem:[#allocation4 + $0x640] sm:$0xff]
    %v602 = vld [vmem:[#allocation4 + $0x648] sm:$0xff]
    %v603 = vld [vmem:[#allocation4 + $0x650] sm:$0xff]
    %v604 = vld [vmem:[#allocation4 + $0x658] sm:$0xff]
    %v605 = vld [vmem:[#allocation4 + $0x660] sm:$0xff]
    %v606 = vld [vmem:[#allocation4 + $0x668] sm:$0xff]
    %v607 = vld [vmem:[#allocation4 + $0x670] sm:$0xff]
    %v608 = vld [vmem:[#allocation4 + $0x678] sm:$0xff]
    %v609 = vld [vmem:[#allocation4 + $0x680] sm:$0xff]
    %v610 = vld [vmem:[#allocation4 + $0x688] sm:$0xff]
    %v611 = vld [vmem:[#allocation4 + $0x690] sm:$0xff]
    %v612 = vld [vmem:[#allocation4 + $0x698] sm:$0xff]
    %v613 = vld [vmem:[#allocation4 + $0x6a0] sm:$0xff]
    %v614 = vld [vmem:[#allocation4 + $0x6a8] sm:$0xff]
    %v615 = vld [vmem:[#allocation4 + $0x6b0] sm:$0xff]
    %v616 = vld [vmem:[#allocation4 + $0x6b8] sm:$0xff]
    %v617 = vld [vmem:[#allocation4 + $0x6c0] sm:$0xff]
    %v618 = vld [vmem:[#allocation4 + $0x6c8] sm:$0xff]
    %v619 = vld [vmem:[#allocation4 + $0x6d0] sm:$0xff]
    %v620 = vld [vmem:[#allocation4 + $0x6d8] sm:$0xff]
    %v621 = vld [vmem:[#allocation4 + $0x6e0] sm:$0xff]
    %v622 = vld [vmem:[#allocation4 + $0x6e8] sm:$0xff]
    %v623 = vld [vmem:[#allocation4 + $0x6f0] sm:$0xff]
    %v624 = vld [vmem:[#allocation4 + $0x6f8] sm:$0xff]
    %v625 = vld [vmem:[#allocation4 + $0x700] sm:$0xff]
    %v626 = vld [vmem:[#allocation4 + $0x708] sm:$0xff]
    %v627 = vld [vmem:[#allocation4 + $0x710] sm:$0xff]
    %v628 = vld [vmem:[#allocation4 + $0x718] sm:$0xff]
    %v629 = vld [vmem:[#allocation4 + $0x720] sm:$0xff]
    %v630 = vld [vmem:[#allocation4 + $0x728] sm:$0xff]
    %v631 = vld [vmem:[#allocation4 + $0x730] sm:$0xff]
    %v632 = vld [vmem:[#allocation4 + $0x738] sm:$0xff]
    %v633 = vld [vmem:[#allocation4 + $0x740] sm:$0xff]
    %v634 = vld [vmem:[#allocation4 + $0x748] sm:$0xff]
    %v635 = vld [vmem:[#allocation4 + $0x750] sm:$0xff]
    %v636 = vld [vmem:[#allocation4 + $0x758] sm:$0xff]
    %v637 = vld [vmem:[#allocation4 + $0x760] sm:$0xff]
    %v638 = vld [vmem:[#allocation4 + $0x768] sm:$0xff]
    %v639 = vld [vmem:[#allocation4 + $0x770] sm:$0xff]
    %v640 = vld [vmem:[#allocation4 + $0x778] sm:$0xff]
    %v641 = vld [vmem:[#allocation4 + $0x780] sm:$0xff]
    %v642 = vld [vmem:[#allocation4 + $0x788] sm:$0xff]
    %v643 = vld [vmem:[#allocation4 + $0x790] sm:$0xff]
    %v644 = vld [vmem:[#allocation4 + $0x798] sm:$0xff]
    %v645 = vld [vmem:[#allocation4 + $0x7a0] sm:$0xff]
    %v646 = vld [vmem:[#allocation4 + $0x7a8] sm:$0xff]
    %v647 = vld [vmem:[#allocation4 + $0x7b0] sm:$0xff]
    %v648 = vld [vmem:[#allocation4 + $0x7b8] sm:$0xff]
    %v649 = vld [vmem:[#allocation4 + $0x7c0] sm:$0xff]
    %v650 = vld [vmem:[#allocation4 + $0x7c8] sm:$0xff]
    %v651 = vld [vmem:[#allocation4 + $0x7d0] sm:$0xff]
    %v652 = vld [vmem:[#allocation4 + $0x7d8] sm:$0xff]
    %v653 = vld [vmem:[#allocation4 + $0x7e0] sm:$0xff]
    %v654 = vld [vmem:[#allocation4 + $0x7e8] sm:$0xff]
    %v655 = vld [vmem:[#allocation4 + $0x7f0] sm:$0xff]
    %v656 = vld [vmem:[#allocation4 + $0x7f8] sm:$0xff]
    %v657 = vld [vmem:[%s4] sm:$0xf]
    %v659 = vlaneseq
    %v660 = vshrl.u32 %v659, 7
    %v661 = vsub.s32 0, %v660
    %v662 = vrot.slane %v657, %v661
    %v663 = vlaneseq
    %v664 = vshrl.u32 %v663, 7
    %v665 = vsub.s32 1, %v664
    %v666 = vrot.slane %v657, %v665
    %v667 = vlaneseq
    %v668 = vshrl.u32 %v667, 7
    %v669 = vsub.s32 2, %v668
    %v670 = vrot.slane %v657, %v669
    %v671 = vlaneseq
    %v672 = vshrl.u32 %v671, 7
    %v673 = vsub.s32 3, %v672
    %v674 = vrot.slane %v657, %v673
    %679 = vmatprep.subr.mxu0 %v402
    %680 = vmatpush1.msra.mxu0 %v401
    %681 = vmatprep.subr.mxu0 %v406
    %682 = vmatpush1.msra.mxu0 %v405
    %683 = vmatprep.subr.mxu0 %v410
    %684 = vmatpush1.msra.mxu0 %v409
    %685 = vmatprep.subr.mxu0 %v414
    %686 = vmatpush1.msra.mxu0 %v413
    %687 = vmatprep.subr.mxu0 %v418
    %688 = vmatpush1.msra.mxu0 %v417
    %689 = vmatprep.subr.mxu0 %v422
    %690 = vmatpush1.msra.mxu0 %v421
    %691 = vmatprep.subr.mxu0 %v426
    %692 = vmatpush1.msra.mxu0 %v425
    %693 = vmatprep.subr.mxu0 %v430
    %694 = vmatpush1.msra.mxu0 %v429
    %695 = vmatprep.subr.mxu0 %v434
    %696 = vmatpush1.msra.mxu0 %v433
    %697 = vmatprep.subr.mxu0 %v438
    %698 = vmatpush1.msra.mxu0 %v437
    %699 = vmatprep.subr.mxu0 %v442
    %700 = vmatpush1.msra.mxu0 %v441
    %701 = vmatprep.subr.mxu0 %v446
    %702 = vmatpush1.msra.mxu0 %v445
    %703 = vmatprep.subr.mxu0 %v450
    %704 = vmatpush1.msra.mxu0 %v449
    %705 = vmatprep.subr.mxu0 %v454
    %706 = vmatpush1.msra.mxu0 %v453
    %707 = vmatprep.subr.mxu0 %v458
    %708 = vmatpush1.msra.mxu0 %v457
    %709 = vmatprep.subr.mxu0 %v462
    %710 = vmatpush1.msra.mxu0 %v461
    %711 = vmatprep.subr.mxu0 %v466
    %712 = vmatpush1.msra.mxu0 %v465
    %713 = vmatprep.subr.mxu0 %v470
    %714 = vmatpush1.msra.mxu0 %v469
    %715 = vmatprep.subr.mxu0 %v474
    %716 = vmatpush1.msra.mxu0 %v473
    %717 = vmatprep.subr.mxu0 %v478
    %718 = vmatpush1.msra.mxu0 %v477
    %719 = vmatprep.subr.mxu0 %v482
    %720 = vmatpush1.msra.mxu0 %v481
    %721 = vmatprep.subr.mxu0 %v486
    %722 = vmatpush1.msra.mxu0 %v485
    %723 = vmatprep.subr.mxu0 %v490
    %724 = vmatpush1.msra.mxu0 %v489
    %725 = vmatprep.subr.mxu0 %v494
    %726 = vmatpush1.msra.mxu0 %v493
    %727 = vmatprep.subr.mxu0 %v498
    %728 = vmatpush1.msra.mxu0 %v497
    %729 = vmatprep.subr.mxu0 %v502
    %730 = vmatpush1.msra.mxu0 %v501
    %731 = vmatprep.subr.mxu0 %v506
    %732 = vmatpush1.msra.mxu0 %v505
    %733 = vmatprep.subr.mxu0 %v510
    %734 = vmatpush1.msra.mxu0 %v509
    %735 = vmatprep.subr.mxu0 %v514
    %736 = vmatpush1.msra.mxu0 %v513
    %737 = vmatprep.subr.mxu0 %v518
    %738 = vmatpush1.msra.mxu0 %v517
    %739 = vmatprep.subr.mxu0 %v522
    %740 = vmatpush1.msra.mxu0 %v521
    %741 = vmatprep.subr.mxu0 %v526
    %742 = vmatpush1.msra.mxu0 %v525
    %743 = vmatprep.mubr.f32.mxu0 %v398
    %744 = vmatmul.mubr.f32.gmra.mrb[0].mxu0 %v397
    %v745 = vpop.f32.mrb[0].mxu0
    %v746 = vadd.f32 %v662, %v745
    %v747 = vpop.f32.mrb[0].mxu0
    %v748 = vadd.f32 %v666, %v747
    %749 = vdwg.mxu0
    %750 = vmatprep.subr.mxu0 %v530
    %751 = vmatpush1.msra.mxu0 %v529
    %752 = vmatprep.subr.mxu0 %v534
    %753 = vmatpush1.msra.mxu0 %v533
    %754 = vmatprep.subr.mxu0 %v538
    %755 = vmatpush1.msra.mxu0 %v537
    %756 = vmatprep.subr.mxu0 %v542
    %757 = vmatpush1.msra.mxu0 %v541
    %758 = vmatprep.subr.mxu0 %v546
    %759 = vmatpush1.msra.mxu0 %v545
    %760 = vmatprep.subr.mxu0 %v550
    %761 = vmatpush1.msra.mxu0 %v549
    %762 = vmatprep.subr.mxu0 %v554
    %763 = vmatpush1.msra.mxu0 %v553
    %764 = vmatprep.subr.mxu0 %v558
    %765 = vmatpush1.msra.mxu0 %v557
    %766 = vmatprep.subr.mxu0 %v562
    %767 = vmatpush1.msra.mxu0 %v561
    %768 = vmatprep.subr.mxu0 %v566
    %769 = vmatpush1.msra.mxu0 %v565
    %770 = vmatprep.subr.mxu0 %v570
    %771 = vmatpush1.msra.mxu0 %v569
    %772 = vmatprep.subr.mxu0 %v574
    %773 = vmatpush1.msra.mxu0 %v573
    %774 = vmatprep.subr.mxu0 %v578
    %775 = vmatpush1.msra.mxu0 %v577
    %776 = vmatprep.subr.mxu0 %v582
    %777 = vmatpush1.msra.mxu0 %v581
    %778 = vmatprep.subr.mxu0 %v586
    %779 = vmatpush1.msra.mxu0 %v585
    %780 = vmatprep.subr.mxu0 %v590
    %781 = vmatpush1.msra.mxu0 %v589
    %782 = vmatprep.subr.mxu0 %v594
    %783 = vmatpush1.msra.mxu0 %v593
    %784 = vmatprep.subr.mxu0 %v598
    %785 = vmatpush1.msra.mxu0 %v597
    %786 = vmatprep.subr.mxu0 %v602
    %787 = vmatpush1.msra.mxu0 %v601
    %788 = vmatprep.subr.mxu0 %v606
    %789 = vmatpush1.msra.mxu0 %v605
    %790 = vmatprep.subr.mxu0 %v610
    %791 = vmatpush1.msra.mxu0 %v609
    %792 = vmatprep.subr.mxu0 %v614
    %793 = vmatpush1.msra.mxu0 %v613
    %794 = vmatprep.subr.mxu0 %v618
    %795 = vmatpush1.msra.mxu0 %v617
    %796 = vmatprep.subr.mxu0 %v622
    %797 = vmatpush1.msra.mxu0 %v621
    %798 = vmatprep.subr.mxu0 %v626
    %799 = vmatpush1.msra.mxu0 %v625
    %800 = vmatprep.subr.mxu0 %v630
    %801 = vmatpush1.msra.mxu0 %v629
    %802 = vmatprep.subr.mxu0 %v634
    %803 = vmatpush1.msra.mxu0 %v633
    %804 = vmatprep.subr.mxu0 %v638
    %805 = vmatpush1.msra.mxu0 %v637
    %806 = vmatprep.subr.mxu0 %v642
    %807 = vmatpush1.msra.mxu0 %v641
    %808 = vmatprep.subr.mxu0 %v646
    %809 = vmatpush1.msra.mxu0 %v645
    %810 = vmatprep.subr.mxu0 %v650
    %811 = vmatpush1.msra.mxu0 %v649
    %812 = vmatprep.subr.mxu0 %v654
    %813 = vmatpush1.msra.mxu0 %v653
    %814 = vmatprep.mubr.f32.mxu0 %v400
    %815 = vmatmul.mubr.f32.gmra.mrb[0].mxu0 %v399
    %v816 = vpop.f32.mrb[0].mxu0
    %v817 = vadd.f32 %v746, %v816
    %v818 = vpop.f32.mrb[0].mxu0
    %v819 = vadd.f32 %v748, %v818
    %820 = vdwg.mxu0
    %821 = vmatprep.subr.mxu0 %v404
    %822 = vmatpush1.msra.mxu0 %v403
    %823 = vmatprep.subr.mxu0 %v408
    %824 = vmatpush1.msra.mxu0 %v407
    %825 = vmatprep.subr.mxu0 %v412
    %826 = vmatpush1.msra.mxu0 %v411
    %827 = vmatprep.subr.mxu0 %v416
    %828 = vmatpush1.msra.mxu0 %v415
    %829 = vmatprep.subr.mxu0 %v420
    %830 = vmatpush1.msra.mxu0 %v419
    %831 = vmatprep.subr.mxu0 %v424
    %832 = vmatpush1.msra.mxu0 %v423
    %833 = vmatprep.subr.mxu0 %v428
    %834 = vmatpush1.msra.mxu0 %v427
    %835 = vmatprep.subr.mxu0 %v432
    %836 = vmatpush1.msra.mxu0 %v431
    %837 = vmatprep.subr.mxu0 %v436
    %838 = vmatpush1.msra.mxu0 %v435
    %839 = vmatprep.subr.mxu0 %v440
    %840 = vmatpush1.msra.mxu0 %v439
    %841 = vmatprep.subr.mxu0 %v444
    %842 = vmatpush1.msra.mxu0 %v443
    %843 = vmatprep.subr.mxu0 %v448
    %844 = vmatpush1.msra.mxu0 %v447
    %845 = vmatprep.subr.mxu0 %v452
    %846 = vmatpush1.msra.mxu0 %v451
    %847 = vmatprep.subr.mxu0 %v456
    %848 = vmatpush1.msra.mxu0 %v455
    %849 = vmatprep.subr.mxu0 %v460
    %850 = vmatpush1.msra.mxu0 %v459
    %851 = vmatprep.subr.mxu0 %v464
    %852 = vmatpush1.msra.mxu0 %v463
    %853 = vmatprep.subr.mxu0 %v468
    %854 = vmatpush1.msra.mxu0 %v467
    %855 = vmatprep.subr.mxu0 %v472
    %856 = vmatpush1.msra.mxu0 %v471
    %857 = vmatprep.subr.mxu0 %v476
    %858 = vmatpush1.msra.mxu0 %v475
    %859 = vmatprep.subr.mxu0 %v480
    %860 = vmatpush1.msra.mxu0 %v479
    %861 = vmatprep.subr.mxu0 %v484
    %862 = vmatpush1.msra.mxu0 %v483
    %863 = vmatprep.subr.mxu0 %v488
    %864 = vmatpush1.msra.mxu0 %v487
    %865 = vmatprep.subr.mxu0 %v492
    %866 = vmatpush1.msra.mxu0 %v491
    %867 = vmatprep.subr.mxu0 %v496
    %868 = vmatpush1.msra.mxu0 %v495
    %869 = vmatprep.subr.mxu0 %v500
    %870 = vmatpush1.msra.mxu0 %v499
    %871 = vmatprep.subr.mxu0 %v504
    %872 = vmatpush1.msra.mxu0 %v503
    %873 = vmatprep.subr.mxu0 %v508
    %874 = vmatpush1.msra.mxu0 %v507
    %875 = vmatprep.subr.mxu0 %v512
    %876 = vmatpush1.msra.mxu0 %v511
    %877 = vmatprep.subr.mxu0 %v516
    %878 = vmatpush1.msra.mxu0 %v515
    %879 = vmatprep.subr.mxu0 %v520
    %880 = vmatpush1.msra.mxu0 %v519
    %881 = vmatprep.subr.mxu0 %v524
    %882 = vmatpush1.msra.mxu0 %v523
    %883 = vmatprep.subr.mxu0 %v528
    %884 = vmatpush1.msra.mxu0 %v527
    %885 = vmatprep.mubr.f32.mxu0 %v398
    %886 = vmatmul.mubr.f32.gmra.mrb[0].mxu0 %v397
    %v887 = vpop.f32.mrb[0].mxu0
    %v888 = vadd.f32 %v670, %v887
    %v889 = vpop.f32.mrb[0].mxu0
    %v890 = vadd.f32 %v674, %v889
    %891 = vdwg.mxu0
    %892 = vmatprep.subr.mxu0 %v532
    %893 = vmatpush1.msra.mxu0 %v531
    %894 = vmatprep.subr.mxu0 %v536
    %895 = vmatpush1.msra.mxu0 %v535
    %896 = vmatprep.subr.mxu0 %v540
    %897 = vmatpush1.msra.mxu0 %v539
    %898 = vmatprep.subr.mxu0 %v544
    %899 = vmatpush1.msra.mxu0 %v543
    %900 = vmatprep.subr.mxu0 %v548
    %901 = vmatpush1.msra.mxu0 %v547
    %902 = vmatprep.subr.mxu0 %v552
    %903 = vmatpush1.msra.mxu0 %v551
    %904 = vmatprep.subr.mxu0 %v556
    %905 = vmatpush1.msra.mxu0 %v555
    %906 = vmatprep.subr.mxu0 %v560
    %907 = vmatpush1.msra.mxu0 %v559
    %908 = vmatprep.subr.mxu0 %v564
    %909 = vmatpush1.msra.mxu0 %v563
    %910 = vmatprep.subr.mxu0 %v568
    %911 = vmatpush1.msra.mxu0 %v567
    %912 = vmatprep.subr.mxu0 %v572
    %913 = vmatpush1.msra.mxu0 %v571
    %914 = vmatprep.subr.mxu0 %v576
    %915 = vmatpush1.msra.mxu0 %v575
    %916 = vmatprep.subr.mxu0 %v580
    %917 = vmatpush1.msra.mxu0 %v579
    %918 = vmatprep.subr.mxu0 %v584
    %919 = vmatpush1.msra.mxu0 %v583
    %920 = vmatprep.subr.mxu0 %v588
    %921 = vmatpush1.msra.mxu0 %v587
    %922 = vmatprep.subr.mxu0 %v592
    %923 = vmatpush1.msra.mxu0 %v591
    %924 = vmatprep.subr.mxu0 %v596
    %925 = vmatpush1.msra.mxu0 %v595
    %926 = vmatprep.subr.mxu0 %v600
    %927 = vmatpush1.msra.mxu0 %v599
    %928 = vmatprep.subr.mxu0 %v604
    %929 = vmatpush1.msra.mxu0 %v603
    %930 = vmatprep.subr.mxu0 %v608
    %931 = vmatpush1.msra.mxu0 %v607
    %932 = vmatprep.subr.mxu0 %v612
    %933 = vmatpush1.msra.mxu0 %v611
    %934 = vmatprep.subr.mxu0 %v616
    %935 = vmatpush1.msra.mxu0 %v615
    %936 = vmatprep.subr.mxu0 %v620
    %937 = vmatpush1.msra.mxu0 %v619
    %938 = vmatprep.subr.mxu0 %v624
    %939 = vmatpush1.msra.mxu0 %v623
    %940 = vmatprep.subr.mxu0 %v628
    %941 = vmatpush1.msra.mxu0 %v627
    %942 = vmatprep.subr.mxu0 %v632
    %943 = vmatpush1.msra.mxu0 %v631
    %944 = vmatprep.subr.mxu0 %v636
    %945 = vmatpush1.msra.mxu0 %v635
    %946 = vmatprep.subr.mxu0 %v640
    %947 = vmatpush1.msra.mxu0 %v639
    %948 = vmatprep.subr.mxu0 %v644
    %949 = vmatpush1.msra.mxu0 %v643
    %950 = vmatprep.subr.mxu0 %v648
    %951 = vmatpush1.msra.mxu0 %v647
    %952 = vmatprep.subr.mxu0 %v652
    %953 = vmatpush1.msra.mxu0 %v651
    %954 = vmatprep.subr.mxu0 %v656
    %955 = vmatpush1.msra.mxu0 %v655
    %956 = vmatprep.mubr.f32.mxu0 %v400
    %957 = vmatmul.mubr.f32.gmra.mrb[0].mxu0 %v399
    %v958 = vpop.f32.mrb[0].mxu0
    %v959 = vadd.f32 %v888, %v958
    %v960 = vpop.f32.mrb[0].mxu0
    %v961 = vadd.f32 %v890, %v960
    %962 = vdwg.mxu0
    %v963 = vtanh.pop %v817
    %v964 = vtanh.pop %v819
    %v965 = vtanh.pop %v959
    %v966 = vtanh.pop %v961
    %v967 = vmax.f32 %v963, %v964
    %v968 = vmax.f32 %v965, %v966
    %v969 = vmax.f32 %v967, %v968
    %v970 = vld [vmem:[#allocation6] sm:$0xff]
    %v971 = vld [vmem:[#allocation6 + $0x8] sm:$0xff]
    %v972 = vld [vmem:[#allocation6 + $0x10] sm:$0xff]
    %v973 = vld [vmem:[#allocation6 + $0x18] sm:$0xff]
    %v974 = vld [vmem:[#allocation6 + $0x20] sm:$0xff]
    %v975 = vld [vmem:[#allocation6 + $0x28] sm:$0xff]
    %v976 = vld [vmem:[#allocation6 + $0x30] sm:$0xff]
    %v977 = vld [vmem:[#allocation6 + $0x38] sm:$0xff]
    %v978 = vld [vmem:[#allocation6 + $0x40] sm:$0xff]
    %v979 = vld [vmem:[#allocation6 + $0x48] sm:$0xff]
    %v980 = vld [vmem:[#allocation6 + $0x50] sm:$0xff]
    %v981 = vld [vmem:[#allocation6 + $0x58] sm:$0xff]
    %v982 = vld [vmem:[#allocation6 + $0x60] sm:$0xff]
    %v983 = vld [vmem:[#allocation6 + $0x68] sm:$0xff]
    %v984 = vld [vmem:[#allocation6 + $0x70] sm:$0xff]
    %v985 = vld [vmem:[#allocation6 + $0x78] sm:$0xff]
    %v986 = vld [vmem:[%s6] sm:$0x1]
    %v988 = vlaneseq
    %v989 = vshrl.u32 %v988, 7
    %v990 = vsub.s32 0, %v989
    %v991 = vrot.slane %v986, %v990
    %993 = vmatprep.subr.mxu0 0.0
    %994 = vmatpush1.msra.mxu0 %v970
    %995 = vmatprep.subr.mxu0 0.0
    %996 = vmatpush1.msra.mxu0 %v971
    %997 = vmatprep.subr.mxu0 0.0
    %998 = vmatpush1.msra.mxu0 %v972
    %999 = vmatprep.subr.mxu0 0.0
    %1000 = vmatpush1.msra.mxu0 %v973
    %1001 = vmatprep.subr.mxu0 0.0
    %1002 = vmatpush1.msra.mxu0 %v974
    %1003 = vmatprep.subr.mxu0 0.0
    %1004 = vmatpush1.msra.mxu0 %v975
    %1005 = vmatprep.subr.mxu0 0.0
    %1006 = vmatpush1.msra.mxu0 %v976
    %1007 = vmatprep.subr.mxu0 0.0
    %1008 = vmatpush1.msra.mxu0 %v977
    %1009 = vmatprep.subr.mxu0 0.0
    %1010 = vmatpush1.msra.mxu0 %v978
    %1011 = vmatprep.subr.mxu0 0.0
    %1012 = vmatpush1.msra.mxu0 %v979
    %1013 = vmatprep.subr.mxu0 0.0
    %1014 = vmatpush1.msra.mxu0 %v980
    %1015 = vmatprep.subr.mxu0 0.0
    %1016 = vmatpush1.msra.mxu0 %v981
    %1017 = vmatprep.subr.mxu0 0.0
    %1018 = vmatpush1.msra.mxu0 %v982
    %1019 = vmatprep.subr.mxu0 0.0
    %1020 = vmatpush1.msra.mxu0 %v983
    %1021 = vmatprep.subr.mxu0 0.0
    %1022 = vmatpush1.msra.mxu0 %v984
    %1023 = vmatprep.subr.mxu0 0.0
    %1024 = vmatpush1.msra.mxu0 %v985
    %1025 = vmatprep.subr.mxu0 0.0
    %1026 = vmatpush1.msra.mxu0 0.0
    %1027 = vmatprep.subr.mxu0 0.0
    %1028 = vmatpush1.msra.mxu0 0.0
    %1029 = vmatprep.subr.mxu0 0.0
    %1030 = vmatpush1.msra.mxu0 0.0
    %1031 = vmatprep.subr.mxu0 0.0
    %1032 = vmatpush1.msra.mxu0 0.0
    %1033 = vmatprep.subr.mxu0 0.0
    %1034 = vmatpush1.msra.mxu0 0.0
    %1035 = vmatprep.subr.mxu0 0.0
    %1036 = vmatpush1.msra.mxu0 0.0
    %1037 = vmatprep.subr.mxu0 0.0
    %1038 = vmatpush1.msra.mxu0 0.0
    %1039 = vmatprep.subr.mxu0 0.0
    %1040 = vmatpush1.msra.mxu0 0.0
    %1041 = vmatprep.subr.mxu0 0.0
    %1042 = vmatpush1.msra.mxu0 0.0
    %1043 = vmatprep.subr.mxu0 0.0
    %1044 = vmatpush1.msra.mxu0 0.0
    %1045 = vmatprep.subr.mxu0 0.0
    %1046 = vmatpush1.msra.mxu0 0.0
    %1047 = vmatprep.subr.mxu0 0.0
    %1048 = vmatpush1.msra.mxu0 0.0
    %1049 = vmatprep.subr.mxu0 0.0
    %1050 = vmatpush1.msra.mxu0 0.0
    %1051 = vmatprep.subr.mxu0 0.0
    %1052 = vmatpush1.msra.mxu0 0.0
    %1053 = vmatprep.subr.mxu0 0.0
    %1054 = vmatpush1.msra.mxu0 0.0
    %1055 = vmatprep.subr.mxu0 0.0
    %1056 = vmatpush1.msra.mxu0 0.0
    %1057 = vmatprep.mubr.f32.mxu0 0.0
    %1058 = vmatmul.mubr.f32.gmra.mrb[0].mxu0 %v969
    %v1059 = vpop.f32.mrb[0].mxu0
    %v1060 = vadd.f32 %v991, %v1059
    %v1061 = vpop.f32.mrb[0].mxu0
    %1062 = vdwg.mxu0
    %v1063 = vld [vmem:[%s7] sm:$0xff]
    %v1064 = vld [vmem:[%s7 + $0x8] sm:$0xff]
    %v1065 = vld [vmem:[%s7 + $0x10] sm:$0xff]
    %v1066 = vld [vmem:[%s7 + $0x18] sm:$0xff]
    %v1067 = vld [vmem:[%s7 + $0x20] sm:$0xff]
    %v1068 = vld [vmem:[%s7 + $0x28] sm:$0xff]
    %v1069 = vld [vmem:[%s7 + $0x30] sm:$0xff]
    %v1070 = vld [vmem:[%s7 + $0x38] sm:$0xff]
    %v1071 = vld [vmem:[%s7 + $0x40] sm:$0xff]
    %v1072 = vld [vmem:[%s7 + $0x48] sm:$0xff]
    %v1073 = vld [vmem:[%s7 + $0x50] sm:$0xff]
    %v1074 = vld [vmem:[%s7 + $0x58] sm:$0xff]
    %v1075 = vld [vmem:[%s7 + $0x60] sm:$0xff]
    %v1076 = vld [vmem:[%s7 + $0x68] sm:$0xff]
    %v1077 = vld [vmem:[%s7 + $0x70] sm:$0xff]
    %v1078 = vld [vmem:[%s7 + $0x78] sm:$0xff]
    %v1079 = vld [vmem:[%s7 + $0x80] sm:$0xff]
    %v1080 = vld [vmem:[%s7 + $0x88] sm:$0xff]
    %v1081 = vld [vmem:[%s7 + $0x90] sm:$0xff]
    %v1082 = vld [vmem:[%s7 + $0x98] sm:$0xff]
    %v1083 = vld [vmem:[%s7 + $0xa0] sm:$0xff]
    %v1084 = vld [vmem:[%s7 + $0xa8] sm:$0xff]
    %v1085 = vld [vmem:[%s7 + $0xb0] sm:$0xff]
    %v1086 = vld [vmem:[%s7 + $0xb8] sm:$0xff]
    %v1087 = vld [vmem:[%s7 + $0xc0] sm:$0xff]
    %v1088 = vld [vmem:[%s7 + $0xc8] sm:$0xff]
    %v1089 = vld [vmem:[%s7 + $0xd0] sm:$0xff]
    %v1090 = vld [vmem:[%s7 + $0xd8] sm:$0xff]
    %v1091 = vld [vmem:[%s7 + $0xe0] sm:$0xff]
    %v1092 = vld [vmem:[%s7 + $0xe8] sm:$0xff]
    %v1093 = vld [vmem:[%s7 + $0xf0] sm:$0xff]
    %v1094 = vld [vmem:[%s7 + $0xf8] sm:$0xff]
    %v1095 = vld [vmem:[%s8] sm:$0x3]
    %v1097 = vlaneseq
    %v1098 = vshrl.u32 %v1097, 7
    %v1099 = vsub.s32 0, %v1098
    %v1100 = vrot.slane %v1095, %v1099
    %v1101 = vlaneseq
    %v1102 = vshrl.u32 %v1101, 7
    %v1103 = vsub.s32 1, %v1102
    %v1104 = vrot.slane %v1095, %v1103
    %1107 = vmatprep.subr.mxu0 %v1064
    %1108 = vmatpush1.msra.mxu0 %v1063
    %1109 = vmatprep.subr.mxu0 %v1066
    %1110 = vmatpush1.msra.mxu0 %v1065
    %1111 = vmatprep.subr.mxu0 %v1068
    %1112 = vmatpush1.msra.mxu0 %v1067
    %1113 = vmatprep.subr.mxu0 %v1070
    %1114 = vmatpush1.msra.mxu0 %v1069
    %1115 = vmatprep.subr.mxu0 %v1072
    %1116 = vmatpush1.msra.mxu0 %v1071
    %1117 = vmatprep.subr.mxu0 %v1074
    %1118 = vmatpush1.msra.mxu0 %v1073
    %1119 = vmatprep.subr.mxu0 %v1076
    %1120 = vmatpush1.msra.mxu0 %v1075
    %1121 = vmatprep.subr.mxu0 %v1078
    %1122 = vmatpush1.msra.mxu0 %v1077
    %1123 = vmatprep.subr.mxu0 %v1080
    %1124 = vmatpush1.msra.mxu0 %v1079
    %1125 = vmatprep.subr.mxu0 %v1082
    %1126 = vmatpush1.msra.mxu0 %v1081
    %1127 = vmatprep.subr.mxu0 %v1084
    %1128 = vmatpush1.msra.mxu0 %v1083
    %1129 = vmatprep.subr.mxu0 %v1086
    %1130 = vmatpush1.msra.mxu0 %v1085
    %1131 = vmatprep.subr.mxu0 %v1088
    %1132 = vmatpush1.msra.mxu0 %v1087
    %1133 = vmatprep.subr.mxu0 %v1090
    %1134 = vmatpush1.msra.mxu0 %v1089
    %1135 = vmatprep.subr.mxu0 %v1092
    %1136 = vmatpush1.msra.mxu0 %v1091
    %1137 = vmatprep.subr.mxu0 %v1094
    %1138 = vmatpush1.msra.mxu0 %v1093
    %1139 = vmatprep.subr.mxu0 0.0
    %1140 = vmatpush1.msra.mxu0 0.0
    %1141 = vmatprep.subr.mxu0 0.0
    %1142 = vmatpush1.msra.mxu0 0.0
    %1143 = vmatprep.subr.mxu0 0.0
    %1144 = vmatpush1.msra.mxu0 0.0
    %1145 = vmatprep.subr.mxu0 0.0
    %1146 = vmatpush1.msra.mxu0 0.0
    %1147 = vmatprep.subr.mxu0 0.0
    %1148 = vmatpush1.msra.mxu0 0.0
    %1149 = vmatprep.subr.mxu0 0.0
    %1150 = vmatpush1.msra.mxu0 0.0
    %1151 = vmatprep.subr.mxu0 0.0
    %1152 = vmatpush1.msra.mxu0 0.0
    %1153 = vmatprep.subr.mxu0 0.0
    %1154 = vmatpush1.msra.mxu0 0.0
    %1155 = vmatprep.subr.mxu0 0.0
    %1156 = vmatpush1.msra.mxu0 0.0
    %1157 = vmatprep.subr.mxu0 0.0
    %1158 = vmatpush1.msra.mxu0 0.0
    %1159 = vmatprep.subr.mxu0 0.0
    %1160 = vmatpush1.msra.mxu0 0.0
    %1161 = vmatprep.subr.mxu0 0.0
    %1162 = vmatpush1.msra.mxu0 0.0
    %1163 = vmatprep.subr.mxu0 0.0
    %1164 = vmatpush1.msra.mxu0 0.0
    %1165 = vmatprep.subr.mxu0 0.0
    %1166 = vmatpush1.msra.mxu0 0.0
    %1167 = vmatprep.subr.mxu0 0.0
    %1168 = vmatpush1.msra.mxu0 0.0
    %1169 = vmatprep.subr.mxu0 0.0
    %1170 = vmatpush1.msra.mxu0 0.0
    %1171 = vmatprep.mubr.f32.mxu0 0.0
    %1172 = vmatmul.mubr.f32.gmra.mrb[0].mxu0 %v1060
    %v1173 = vpop.f32.mrb[0].mxu0
    %v1174 = vadd.f32 %v1100, %v1173
    %v1175 = vpop.f32.mrb[0].mxu0
    %v1176 = vadd.f32 %v1104, %v1175
    %1177 = vdwg.mxu0
    %v1178 = vtanh.pop %v1174
    %v1179 = vtanh.pop %v1176
    %v1180 = vld [vmem:[#allocation7] sm:$0xff]
    %v1181 = vld [vmem:[#allocation7 + $0x8] sm:$0xff]
    %v1182 = vld [vmem:[#allocation7 + $0x10] sm:$0xff]
    %v1183 = vld [vmem:[#allocation7 + $0x18] sm:$0xff]
    %v1184 = vld [vmem:[#allocation7 + $0x20] sm:$0xff]
    %v1185 = vld [vmem:[#allocation7 + $0x28] sm:$0xff]
    %v1186 = vld [vmem:[#allocation7 + $0x30] sm:$0xff]
    %v1187 = vld [vmem:[#allocation7 + $0x38] sm:$0xff]
    %v1188 = vld [vmem:[#allocation7 + $0x40] sm:$0xff]
    %v1189 = vld [vmem:[#allocation7 + $0x48] sm:$0xff]
    %v1190 = vld [vmem:[#allocation7 + $0x50] sm:$0xff]
    %v1191 = vld [vmem:[#allocation7 + $0x58] sm:$0xff]
    %v1192 = vld [vmem:[#allocation7 + $0x60] sm:$0xff]
    %v1193 = vld [vmem:[#allocation7 + $0x68] sm:$0xff]
    %v1194 = vld [vmem:[#allocation7 + $0x70] sm:$0xff]
    %v1195 = vld [vmem:[#allocation7 + $0x78] sm:$0xff]
    %v1196 = vld [vmem:[#allocation7 + $0x80] sm:$0xff]
    %v1197 = vld [vmem:[#allocation7 + $0x88] sm:$0xff]
    %v1198 = vld [vmem:[#allocation7 + $0x90] sm:$0xff]
    %v1199 = vld [vmem:[#allocation7 + $0x98] sm:$0xff]
    %v1200 = vld [vmem:[#allocation7 + $0xa0] sm:$0xff]
    %v1201 = vld [vmem:[#allocation7 + $0xa8] sm:$0xff]
    %v1202 = vld [vmem:[#allocation7 + $0xb0] sm:$0xff]
    %v1203 = vld [vmem:[#allocation7 + $0xb8] sm:$0xff]
    %v1204 = vld [vmem:[#allocation7 + $0xc0] sm:$0xff]
    %v1205 = vld [vmem:[#allocation7 + $0xc8] sm:$0xff]
    %v1206 = vld [vmem:[#allocation7 + $0xd0] sm:$0xff]
    %v1207 = vld [vmem:[#allocation7 + $0xd8] sm:$0xff]
    %v1208 = vld [vmem:[#allocation7 + $0xe0] sm:$0xff]
    %v1209 = vld [vmem:[#allocation7 + $0xe8] sm:$0xff]
    %v1210 = vld [vmem:[#allocation7 + $0xf0] sm:$0xff]
    %v1211 = vld [vmem:[#allocation7 + $0xf8] sm:$0xff]
    %v1212 = vld [vmem:[#allocation7 + $0x100] sm:$0xff]
    %v1213 = vld [vmem:[#allocation7 + $0x108] sm:$0xff]
    %v1214 = vld [vmem:[#allocation7 + $0x110] sm:$0xff]
    %v1215 = vld [vmem:[#allocation7 + $0x118] sm:$0xff]
    %v1216 = vld [vmem:[#allocation7 + $0x120] sm:$0xff]
    %v1217 = vld [vmem:[#allocation7 + $0x128] sm:$0xff]
    %v1218 = vld [vmem:[#allocation7 + $0x130] sm:$0xff]
    %v1219 = vld [vmem:[#allocation7 + $0x138] sm:$0xff]
    %v1220 = vld [vmem:[#allocation7 + $0x140] sm:$0xff]
    %v1221 = vld [vmem:[#allocation7 + $0x148] sm:$0xff]
    %v1222 = vld [vmem:[#allocation7 + $0x150] sm:$0xff]
    %v1223 = vld [vmem:[#allocation7 + $0x158] sm:$0xff]
    %v1224 = vld [vmem:[#allocation7 + $0x160] sm:$0xff]
    %v1225 = vld [vmem:[#allocation7 + $0x168] sm:$0xff]
    %v1226 = vld [vmem:[#allocation7 + $0x170] sm:$0xff]
    %v1227 = vld [vmem:[#allocation7 + $0x178] sm:$0xff]
    %v1228 = vld [vmem:[#allocation7 + $0x180] sm:$0xff]
    %v1229 = vld [vmem:[#allocation7 + $0x188] sm:$0xff]
    %v1230 = vld [vmem:[#allocation7 + $0x190] sm:$0xff]
    %v1231 = vld [vmem:[#allocation7 + $0x198] sm:$0xff]
    %v1232 = vld [vmem:[#allocation7 + $0x1a0] sm:$0xff]
    %v1233 = vld [vmem:[#allocation7 + $0x1a8] sm:$0xff]
    %v1234 = vld [vmem:[#allocation7 + $0x1b0] sm:$0xff]
    %v1235 = vld [vmem:[#allocation7 + $0x1b8] sm:$0xff]
    %v1236 = vld [vmem:[#allocation7 + $0x1c0] sm:$0xff]
    %v1237 = vld [vmem:[#allocation7 + $0x1c8] sm:$0xff]
    %v1238 = vld [vmem:[#allocation7 + $0x1d0] sm:$0xff]
    %v1239 = vld [vmem:[#allocation7 + $0x1d8] sm:$0xff]
    %v1240 = vld [vmem:[#allocation7 + $0x1e0] sm:$0xff]
    %v1241 = vld [vmem:[#allocation7 + $0x1e8] sm:$0xff]
    %v1242 = vld [vmem:[#allocation7 + $0x1f0] sm:$0xff]
    %v1243 = vld [vmem:[#allocation7 + $0x1f8] sm:$0xff]
    %v1244 = vld [vmem:[%s10] sm:$0x3]
    %v1246 = vlaneseq
    %v1247 = vshrl.u32 %v1246, 7
    %v1248 = vsub.s32 0, %v1247
    %v1249 = vrot.slane %v1244, %v1248
    %v1250 = vlaneseq
    %v1251 = vshrl.u32 %v1250, 7
    %v1252 = vsub.s32 1, %v1251
    %v1253 = vrot.slane %v1244, %v1252
    %1256 = vmatprep.subr.mxu0 %v1181
    %1257 = vmatpush1.msra.mxu0 %v1180
    %1258 = vmatprep.subr.mxu0 %v1183
    %1259 = vmatpush1.msra.mxu0 %v1182
    %1260 = vmatprep.subr.mxu0 %v1185
    %1261 = vmatpush1.msra.mxu0 %v1184
    %1262 = vmatprep.subr.mxu0 %v1187
    %1263 = vmatpush1.msra.mxu0 %v1186
    %1264 = vmatprep.subr.mxu0 %v1189
    %1265 = vmatpush1.msra.mxu0 %v1188
    %1266 = vmatprep.subr.mxu0 %v1191
    %1267 = vmatpush1.msra.mxu0 %v1190
    %1268 = vmatprep.subr.mxu0 %v1193
    %1269 = vmatpush1.msra.mxu0 %v1192
    %1270 = vmatprep.subr.mxu0 %v1195
    %1271 = vmatpush1.msra.mxu0 %v1194
    %1272 = vmatprep.subr.mxu0 %v1197
    %1273 = vmatpush1.msra.mxu0 %v1196
    %1274 = vmatprep.subr.mxu0 %v1199
    %1275 = vmatpush1.msra.mxu0 %v1198
    %1276 = vmatprep.subr.mxu0 %v1201
    %1277 = vmatpush1.msra.mxu0 %v1200
    %1278 = vmatprep.subr.mxu0 %v1203
    %1279 = vmatpush1.msra.mxu0 %v1202
    %1280 = vmatprep.subr.mxu0 %v1205
    %1281 = vmatpush1.msra.mxu0 %v1204
    %1282 = vmatprep.subr.mxu0 %v1207
    %1283 = vmatpush1.msra.mxu0 %v1206
    %1284 = vmatprep.subr.mxu0 %v1209
    %1285 = vmatpush1.msra.mxu0 %v1208
    %1286 = vmatprep.subr.mxu0 %v1211
    %1287 = vmatpush1.msra.mxu0 %v1210
    %1288 = vmatprep.subr.mxu0 %v1213
    %1289 = vmatpush1.msra.mxu0 %v1212
    %1290 = vmatprep.subr.mxu0 %v1215
    %1291 = vmatpush1.msra.mxu0 %v1214
    %1292 = vmatprep.subr.mxu0 %v1217
    %1293 = vmatpush1.msra.mxu0 %v1216
    %1294 = vmatprep.subr.mxu0 %v1219
    %1295 = vmatpush1.msra.mxu0 %v1218
    %1296 = vmatprep.subr.mxu0 %v1221
    %1297 = vmatpush1.msra.mxu0 %v1220
    %1298 = vmatprep.subr.mxu0 %v1223
    %1299 = vmatpush1.msra.mxu0 %v1222
    %1300 = vmatprep.subr.mxu0 %v1225
    %1301 = vmatpush1.msra.mxu0 %v1224
    %1302 = vmatprep.subr.mxu0 %v1227
    %1303 = vmatpush1.msra.mxu0 %v1226
    %1304 = vmatprep.subr.mxu0 %v1229
    %1305 = vmatpush1.msra.mxu0 %v1228
    %1306 = vmatprep.subr.mxu0 %v1231
    %1307 = vmatpush1.msra.mxu0 %v1230
    %1308 = vmatprep.subr.mxu0 %v1233
    %1309 = vmatpush1.msra.mxu0 %v1232
    %1310 = vmatprep.subr.mxu0 %v1235
    %1311 = vmatpush1.msra.mxu0 %v1234
    %1312 = vmatprep.subr.mxu0 %v1237
    %1313 = vmatpush1.msra.mxu0 %v1236
    %1314 = vmatprep.subr.mxu0 %v1239
    %1315 = vmatpush1.msra.mxu0 %v1238
    %1316 = vmatprep.subr.mxu0 %v1241
    %1317 = vmatpush1.msra.mxu0 %v1240
    %1318 = vmatprep.subr.mxu0 %v1243
    %1319 = vmatpush1.msra.mxu0 %v1242
    %1320 = vmatprep.mubr.f32.mxu0 %v1179
    %1321 = vmatmul.mubr.f32.gmra.mrb[0].mxu0 %v1178
    %v1322 = vpop.f32.mrb[0].mxu0
    %v1323 = vadd.f32 %v1249, %v1322
    %v1324 = vpop.f32.mrb[0].mxu0
    %v1325 = vadd.f32 %v1253, %v1324
    %1326 = vdwg.mxu0
    %v1327 = vmax.f32 %v1323, 0.0
    %v1328 = vmax.f32 %v1325, 0.0
    %v1331 = vcombine.low %v1327, %v1328
    %v1333 = vunpack.c.l.s4 1983009808
    %v1334 = vunpack.c.0.s8 %v1333
    %v1335 = vlaneseq
    %v1336 = vshrl.u32 %v1335, 7
    %v1337 = vsub.s32 %v1334, %v1336
    %v1338 = vrot.slane %v1331, %v1337
    %1340 = vst [vmem:[%s11] sm:$0xf] %v1338
    // Predicated region
    $region62: #{forward.1} parent=1 // pred_check
      _
    $region63: #{forward.1} parent=1 // pred_check_branch
      %1342 = sbr.rel (0) target = $region65
    $region64: #{forward.1} parent=1 // pred_region
      _
    $region65: #{forward.1} parent=1 // pred_fallthru
      _
    // Predicated region
    $region66: #{forward.1} parent=1 // pred_check
      _
    $region67: #{forward.1} parent=1 // pred_check_branch
      %1344 = sbr.rel (0) target = $region69
    $region68: #{forward.1} parent=1 // pred_region
      _
    $region69: #{forward.1} parent=1 // pred_fallthru
      _
    %1345 = vsyncpa [#allocation3], 1
    %1346 = vsyncpa [#allocation5], 1
    %1347 = vsyncpa [#allocation8], 1

</llo_original>
